<compile_context>
chip_gen: v6e
topology: v6e:2x2x1
jax: 0.10.0
libtpu: 0.0.40
codegen_flags: <defaults>
</compile_context>

<pallas_src>
import functools

import jax
import jax.numpy as jnp
from jax.experimental import pallas as pl
from jax.experimental.pallas import tpu as pltpu


_COMPUTE_DTYPE = jnp.bfloat16   # MXU inputs + inter-layer activations
_ACC_DTYPE = jnp.float32        # accumulation / epilogue dtype


def _round_up(x, m):
    return (x + m - 1) // m * m


# ----------------------- generation-aware VMEM budgets -----------------------

def _tpu_vmem_bytes():
    """Per-core VMEM capacity; conservative 64 MiB (v7x per-TC) fallback."""
    try:
        info = pltpu.get_tpu_info()
        v = int(getattr(info, "vmem_capacity_bytes", 0) or 0)
        if v > 0:
            return v
    except Exception:
        pass
    return 64 << 20


def _vmem_budget():
    vmem = _tpu_vmem_bytes()
    target = max(min(int(vmem * 0.40), vmem - (24 << 20)), 8 << 20)
    cap = max(int(vmem * 0.625), 32 << 20)   # 40 MiB on v7x, ~80 MiB on v5e/v6e
    return target, cap


# ----------------------- im2col / tap extraction (XLA glue) -----------------------

def _extract_patches(x, ksize, stride, padding, dilation, pad_value=0.0, tap_axis=-2):
    """x: [N, D, H, W, C] -> taps stacked on `tap_axis`.

    tap_axis=-2 -> [N, Do, Ho, Wo, KK, C]  (im2col for conv)
    tap_axis=0  -> [KK, N, Do, Ho, Wo, C]  (tap-major layout for pooling)
    """
    N, D, H, W, C = x.shape
    kd, kh, kw = ksize
    sd, sh, sw = stride
    pd, ph, pw = padding
    dd, dh, dw = dilation
    xp = jnp.pad(x, ((0, 0), (pd, pd), (ph, ph), (pw, pw), (0, 0)),
                 constant_values=pad_value)
    Do = (D + 2 * pd - dd * (kd - 1) - 1) // sd + 1
    Ho = (H + 2 * ph - dh * (kh - 1) - 1) // sh + 1
    Wo = (W + 2 * pw - dw * (kw - 1) - 1) // sw + 1
    slices = []
    for i in range(kd):
        for j in range(kh):
            for k in range(kw):
                sl = xp[:, i * dd: i * dd + sd * (Do - 1) + 1: sd,
                           j * dh: j * dh + sh * (Ho - 1) + 1: sh,
                           k * dw: k * dw + sw * (Wo - 1) + 1: sw, :]
                slices.append(sl)
    return jnp.stack(slices, axis=tap_axis), (N, Do, Ho, Wo)


# ----------------------- tiling heuristics -----------------------

def _pick_tk(K):
    """K tile: prefer multiples of 256 (MXU depth); trade K padding vs. grid steps."""
    best = None
    for tk in (1024, 768, 512, 384, 256, 128):
        kp = _round_up(K, tk)
        steps = kp // tk
        # padded-K work + ~256 rows-of-K equivalent per grid-step overhead
        key = (kp + 256 * steps, 0 if tk % 256 == 0 else 1, -tk)
        if best is None or key < best[0]:
            best = (key, tk, kp)
    return best[1], best[2]


def _pick_tm(M, tk, cout, add_res, target_bytes):
    """M tile: multiple of 16 (bf16 sublanes) / 256, minimal padding, prefer >=2 blocks."""
    bpe = 2  # bf16
    fixed = 2 * tk * cout * bpe + 2 * cout * 4            # weight double-buffer + bias
    per_row = 2 * tk * bpe + 2 * cout * bpe + cout * 4    # LHS db + bf16 out db + f32 acc
    if add_res:
        per_row += 2 * cout * bpe                         # bf16 residual db
    tm_max = max(256, int((target_bytes - fixed) // max(per_row, 1)))
    M16 = _round_up(M, 16)
    if M16 <= 256:
        return M16
    best = None
    hi = min(tm_max, _round_up(M16, 256))
    for tm in range(256, hi + 1, 256):
        mp = _round_up(M, tm)
        steps = mp // tm
        key = (mp - M, 0 if steps >= 2 else 1, steps)     # pad, then megacore, then steps
        if best is None or key < best[0]:
            best = (key, tm)
    return best[1]


def _conv_vmem_limit(tm, tk, cout, add_res, cap):
    b = 2 * tm * tk * 2            # bf16 LHS (double-buffered)
    b += 2 * tk * cout * 2         # bf16 weights (double-buffered)
    b += 2 * cout * 4              # bias
    b += 2 * tm * cout * 2         # bf16 output tile (revisited)
    b += tm * cout * 4             # f32 accumulator scratch
    if add_res:
        b += 2 * tm * cout * 2     # bf16 residual tile
    return int(min(max(b + (8 << 20), 32 << 20), max(cap, 32 << 20)))


# ----------------------- Pallas kernels (hot path) -----------------------

def _conv_bn_kernel(x_ref, w_ref, b_ref, *rest, relu, add_res):
    """M/K-tiled im2col matmul; f32 accumulation in VMEM scratch; last-K epilogue applies
    folded-BN bias, optional residual add and ReLU, and stores bf16."""
    if add_res:
        r_ref, o_ref, acc_ref = rest
    else:
        o_ref, acc_ref = rest
    k = pl.program_id(1)

    @pl.when(k == 0)
    def _():
        acc_ref[...] = jnp.zeros_like(acc_ref)

    acc_ref[...] += jnp.dot(x_ref[...], w_ref[...],
                            preferred_element_type=jnp.float32)

    @pl.when(k == pl.num_programs(1) - 1)
    def _():
        out = acc_ref[...] + b_ref[...]
        if add_res:
            out = out + r_ref[...].astype(jnp.float32)
        if relu:
            out = jnp.maximum(out, 0.0)
        o_ref[...] = out.astype(o_ref.dtype)


def _max_kernel(x_ref, o_ref):
    # x_ref: [KK, tm, C] (taps on leading axis) -> unrolled elementwise max (pure VPU)
    m = x_ref[0]
    for t in range(1, x_ref.shape[0]):
        m = jnp.maximum(m, x_ref[t])
    o_ref[...] = m


# ----------------------- wrappers -----------------------

def conv3d_bn(x, w, scale, bias, *, stride, padding, dilation,
              relu=True, residual=None):
    """3-D conv (no bias) + folded BatchNorm (+ optional residual) (+ optional ReLU).

    x: [N, D, H, W, Cin]   w: [kd, kh, kw, Cin, Cout]   scale/bias: [Cout]
    residual (optional): [N, Do, Ho, Wo, Cout].  Output is bf16.
    """
    kd, kh, kw, Cin, Cout = w.shape
    x_c = x.astype(_COMPUTE_DTYPE)
    p, (N, Do, Ho, Wo) = _extract_patches(x_c, (kd, kh, kw), stride, padding, dilation)
    M = N * Do * Ho * Wo
    K = kd * kh * kw * Cin
    patches = p.reshape(M, K)

    add_res = residual is not None
    target, cap = _vmem_budget()
    tk, Kp = _pick_tk(K)
    tm = _pick_tm(M, tk, Cout, add_res, target)
    Mp = _round_up(M, tm)

    patches = jnp.pad(patches, ((0, Mp - M), (0, Kp - K)))
    # Fold BN scale into the weights so the epilogue is only `+ bias`.
    w2 = w.reshape(K, Cout).astype(jnp.float32) * scale[None, :].astype(jnp.float32)
    w2 = jnp.pad(w2, ((0, Kp - K), (0, 0))).astype(_COMPUTE_DTYPE)
    b2 = bias.reshape(1, Cout).astype(jnp.float32)

    args = [patches, w2, b2]
    in_specs = [
        pl.BlockSpec((tm, tk), lambda i, k: (i, k)),
        pl.BlockSpec((tk, Cout), lambda i, k: (k, 0)),
        pl.BlockSpec((1, Cout), lambda i, k: (0, 0)),
    ]
    if add_res:
        r = jnp.pad(residual.astype(_COMPUTE_DTYPE).reshape(M, Cout),
                    ((0, Mp - M), (0, 0)))
        args.append(r)
        in_specs.append(pl.BlockSpec((tm, Cout), lambda i, k: (i, 0)))

    kernel = functools.partial(_conv_bn_kernel, relu=relu, add_res=add_res)

    out = pl.pallas_call(
        kernel,
        out_shape=jax.ShapeDtypeStruct((Mp, Cout), _COMPUTE_DTYPE),
        grid=(Mp // tm, Kp // tk),
        in_specs=in_specs,
        out_specs=pl.BlockSpec((tm, Cout), lambda i, k: (i, 0)),
        scratch_shapes=[pltpu.VMEM((tm, Cout), jnp.float32)],
        compiler_params=pltpu.CompilerParams(
            dimension_semantics=("parallel", "arbitrary"),
            vmem_limit_bytes=_conv_vmem_limit(tm, tk, Cout, add_res, cap),
        ),
    )(*args)
    return out[:M].reshape(N, Do, Ho, Wo, Cout)


def maxpool3d(x, *, ksize=3, stride=2, padding=1):
    """MaxPool3d(kernel=3, stride=2, padding=1), NDHWC, bf16, tap-major VPU reduction."""
    p, (N, Do, Ho, Wo) = _extract_patches(
        x, (ksize,) * 3, (stride,) * 3, (padding,) * 3, (1, 1, 1),
        pad_value=-jnp.inf, tap_axis=0)
    C = p.shape[-1]
    KK = ksize ** 3
    M = N * Do * Ho * Wo
    stacked = p.reshape(KK, M, C)

    bpe = stacked.dtype.itemsize
    target, cap = _vmem_budget()
    per_row = (2 * KK + 2) * C * bpe          # in double-buffer + out double-buffer
    tm_max = max(16, (int(target // per_row) // 16) * 16)
    M16 = _round_up(M, 16)
    tm = min(tm_max, M16)
    if M16 >= 512 and tm >= M16:
        tm = _round_up((M16 + 1) // 2, 16)    # >=2 M blocks for megacore sharding
    Mp = _round_up(M, tm)
    stacked = jnp.pad(stacked, ((0, 0), (0, Mp - M), (0, 0)),
                      constant_values=-jnp.inf)
    vmem_limit = int(min(max((2 * KK + 2) * tm * C * bpe + (8 << 20), 32 << 20),
                         max(cap, 32 << 20)))

    out = pl.pallas_call(
        _max_kernel,
        out_shape=jax.ShapeDtypeStruct((Mp, C), x.dtype),
        grid=(Mp // tm,),
        in_specs=[pl.BlockSpec((KK, tm, C), lambda i: (0, i, 0))],
        out_specs=pl.BlockSpec((tm, C), lambda i: (i, 0)),
        compiler_params=pltpu.CompilerParams(
            dimension_semantics=("parallel",),
            vmem_limit_bytes=vmem_limit),
    )(stacked)
    return out[:M].reshape(N, Do, Ho, Wo, C)


# ----------------------- parameter init (deterministic, synthetic) -----------------------

def _make_conv(key, kd, kh, kw, cin, cout):
    fan_in = kd * kh * kw * cin
    std = (2.0 / fan_in) ** 0.5
    # equivalent to PyTorch [Cout, Cin, kd, kh, kw] transposed to [kd, kh, kw, Cin, Cout]
    return std * jax.random.normal(key, (kd, kh, kw, cin, cout), jnp.float32)


def _make_bn(key, c, eps=1e-5):
    k1, k2, k3, k4 = jax.random.split(key, 4)
    gamma = 1.0 + 0.1 * jax.random.normal(k1, (c,), jnp.float32)
    beta = 0.1 * jax.random.normal(k2, (c,), jnp.float32)
    mean = 0.1 * jax.random.normal(k3, (c,), jnp.float32)
    var = 1.0 + 0.1 * jnp.abs(jax.random.normal(k4, (c,), jnp.float32))
    scale = gamma / jnp.sqrt(var + eps)
    bias = beta - mean * scale
    return scale, bias


def init_params(key):
    keys = iter(jax.random.split(key, 64))
    params = {}
    params['conv1_w'] = _make_conv(next(keys), 7, 7, 7, 1, 64)
    params['bn1'] = _make_bn(next(keys), 64)
    inplanes = 64
    # (planes, blocks, stride, dilation) — matches _make_layer calls in the reference
    layer_cfg = [(64, 1, 1, 1), (128, 1, 2, 1), (256, 1, 1, 2), (512, 1, 1, 4)]
    for li, (planes, blocks, stride, dilation) in enumerate(layer_cfg, start=1):
        layer = []
        for bi in range(blocks):
            s = stride if bi == 0 else 1
            blk = {
                'conv1_w': _make_conv(next(keys), 3, 3, 3, inplanes, planes),
                'bn1': _make_bn(next(keys), planes),
                'conv2_w': _make_conv(next(keys), 3, 3, 3, planes, planes),
                'bn2': _make_bn(next(keys), planes),
            }
            if bi == 0 and (s != 1 or inplanes != planes):
                blk['down_w'] = _make_conv(next(keys), 1, 1, 1, inplanes, planes)
                blk['down_bn'] = _make_bn(next(keys), planes)
            layer.append(blk)
            inplanes = planes
        params[f'layer{li}'] = layer
    return params, layer_cfg


# ----------------------- forward -----------------------

def basic_block_forward(x, blk, stride, dilation):
    if 'down_w' in blk:
        residual = conv3d_bn(x, blk['down_w'], *blk['down_bn'],
                             stride=(stride,) * 3, padding=(0, 0, 0),
                             dilation=(1, 1, 1), relu=False)
    else:
        residual = x
    out = conv3d_bn(x, blk['conv1_w'], *blk['bn1'],
                    stride=(stride,) * 3, padding=(dilation,) * 3,
                    dilation=(dilation,) * 3, relu=True)
    out = conv3d_bn(out, blk['conv2_w'], *blk['bn2'],
                    stride=(1, 1, 1), padding=(dilation,) * 3,
                    dilation=(dilation,) * 3, relu=True, residual=residual)
    return out


def resnet_forward(x_ncdhw, params, layer_cfg):
    x = jnp.transpose(x_ncdhw, (0, 2, 3, 4, 1)).astype(_COMPUTE_DTYPE)  # NCDHW -> NDHWC
    x = conv3d_bn(x, params['conv1_w'], *params['bn1'],
                  stride=(2, 2, 2), padding=(3, 3, 3), dilation=(1, 1, 1), relu=True)
    x = maxpool3d(x, ksize=3, stride=2, padding=1)
    feats = []
    for li, (planes, blocks, stride, dilation) in enumerate(layer_cfg, start=1):
        for bi, blk in enumerate(params[f'layer{li}']):
            s = stride if bi == 0 else 1
            x = basic_block_forward(x, blk, s, dilation)
        # NDHWC -> NCDHW, f32 feature maps to match the PyTorch API
        feats.append(jnp.transpose(x, (0, 4, 1, 2, 3)).astype(jnp.float32))
    return feats  # [feat1, feat2, feat3, feat4]


if __name__ == "__main__":
    key = jax.random.PRNGKey(0)
    kp, kx = jax.random.split(key)
    params, layer_cfg = init_params(kp)
    # PyTorch-style NCDHW input: single channel, small volume
    x = jax.random.normal(kx, (2, 1, 16, 16, 16), jnp.float32)
    feats = resnet_forward(x, params, layer_cfg)
    feats = jax.block_until_ready(feats)
    assert feats[0].shape == (2, 64, 4, 4, 4)
    assert feats[1].shape == (2, 128, 2, 2, 2)
    assert feats[2].shape == (2, 256, 2, 2, 2)
    assert feats[3].shape == (2, 512, 2, 2, 2)
    print("KERNEL_OK")
</pallas_src>

<mosaic_0001>
module attributes {stable_mosaic.version = 11 : i64} {
  func.func @_conv_bn_kernel(%arg0: i32, %arg1: i32, %arg2: memref<512x384xbf16, #tpu.memory_space<vmem>>, %arg3: memref<384x64xbf16, #tpu.memory_space<vmem>>, %arg4: memref<1x64xf32, #tpu.memory_space<vmem>>, %arg5: memref<512x64xbf16, #tpu.memory_space<vmem>>, %arg6: memref<512x64xf32, #tpu.memory_space<vmem>>) attributes {dimension_semantics = [#tpu.dimension_semantics<parallel>, #tpu.dimension_semantics<arbitrary>], iteration_bounds = array<i64: 2, 1>, scalar_prefetch = 0 : i64, scratch_operands = 1 : i64, tpu.core_type = #tpu.core_type<tc>, window_params = [{transform_indices = @transform_0, window_bounds = array<i64: 512, 384>}, {transform_indices = @transform_1, window_bounds = array<i64: 384, 64>}, {pipeline_mode = #tpu.pipeline_mode<synchronous>, transform_indices = @transform_2, window_bounds = array<i64: 1, 64>}, {transform_indices = @transform_3, window_bounds = array<i64: 512, 64>}]} {
    %c0_i32 = arith.constant 0 : i32
    %0 = arith.cmpi eq, %arg1, %c0_i32 : i32
    %1 = arith.extui %0 : i1 to i32
    %c0_i32_0 = arith.constant 0 : i32
    %2 = arith.cmpi ne, %1, %c0_i32_0 : i32
    scf.if %2 {
      %cst_10 = arith.constant 0.000000e+00 : f32
      %12 = vector.broadcast %cst_10 : f32 to vector<512x64xf32>
      %c0_11 = arith.constant 0 : index
      %c0_12 = arith.constant 0 : index
      %13 = vector.load %arg6[%c0_11, %c0_12] : memref<512x64xf32, #tpu.memory_space<vmem>>, vector<512x64xf32>
      tpu.vector_store %arg6[%c0_11, %c0_12], %12 {strides = array<i32>} : memref<512x64xf32, #tpu.memory_space<vmem>>, vector<512x64xf32>,
    } else {
    }
    %c0 = arith.constant 0 : index
    %c0_1 = arith.constant 0 : index
    %3 = vector.load %arg6[%c0, %c0_1] : memref<512x64xf32, #tpu.memory_space<vmem>>, vector<512x64xf32>
    %c0_2 = arith.constant 0 : index
    %c0_3 = arith.constant 0 : index
    %4 = vector.load %arg2[%c0_2, %c0_3] : memref<512x384xbf16, #tpu.memory_space<vmem>>, vector<512x384xbf16>
    %c0_4 = arith.constant 0 : index
    %c0_5 = arith.constant 0 : index
    %5 = vector.load %arg3[%c0_4, %c0_5] : memref<384x64xbf16, #tpu.memory_space<vmem>>, vector<384x64xbf16>
    %cst = arith.constant dense<0.000000e+00> : vector<512x64xf32>
    %6 = tpu.matmul %4, %5, %cst {dimension_numbers = #tpu.dot_dimension_numbers<[1], [0], [0], [1], [0, 0, 1, 1], [], []>} : vector<512x384xbf16>, vector<384x64xbf16>, vector<512x64xf32> -> vector<512x64xf32>
    %7 = arith.addf %3, %6 : vector<512x64xf32>
    %c0_6 = arith.constant 0 : index
    %c0_7 = arith.constant 0 : index
    %8 = vector.load %arg6[%c0_6, %c0_7] : memref<512x64xf32, #tpu.memory_space<vmem>>, vector<512x64xf32>
    tpu.vector_store %arg6[%c0_6, %c0_7], %7 {strides = array<i32>} : memref<512x64xf32, #tpu.memory_space<vmem>>, vector<512x64xf32>,
    %c0_i32_8 = arith.constant 0 : i32
    %9 = arith.cmpi eq, %arg1, %c0_i32_8 : i32
    %10 = arith.extui %9 : i1 to i32
    %c0_i32_9 = arith.constant 0 : i32
    %11 = arith.cmpi ne, %10, %c0_i32_9 : i32
    scf.if %11 {
      %c0_10 = arith.constant 0 : index
      %c0_11 = arith.constant 0 : index
      %12 = vector.load %arg6[%c0_10, %c0_11] : memref<512x64xf32, #tpu.memory_space<vmem>>, vector<512x64xf32>
      %c0_12 = arith.constant 0 : index
      %c0_13 = arith.constant 0 : index
      %13 = vector.load %arg4[%c0_12, %c0_13] : memref<1x64xf32, #tpu.memory_space<vmem>>, vector<1x64xf32>
      %14 = vector.broadcast %13 : vector<1x64xf32> to vector<512x64xf32>
      %15 = arith.addf %12, %14 : vector<512x64xf32>
      %cst_14 = arith.constant 0.000000e+00 : f32
      %16 = vector.broadcast %cst_14 : f32 to vector<512x64xf32>
      %17 = arith.maximumf %15, %16 : vector<512x64xf32>
      %18 = arith.truncf %17 : vector<512x64xf32> to vector<512x64xbf16>
      %c0_15 = arith.constant 0 : index
      %c0_16 = arith.constant 0 : index
      %19 = vector.load %arg5[%c0_15, %c0_16] : memref<512x64xbf16, #tpu.memory_space<vmem>>, vector<512x64xbf16>
      tpu.vector_store %arg5[%c0_15, %c0_16], %18 {strides = array<i32>} : memref<512x64xbf16, #tpu.memory_space<vmem>>, vector<512x64xbf16>,
    } else {
    }
    return
  }
  func.func @transform_0(%arg0: i32, %arg1: i32) -> (i32, i32) {
    %c0_i32 = arith.constant 0 : i32
    return %arg0, %arg1 : i32, i32
  }
  func.func @transform_1(%arg0: i32, %arg1: i32) -> (i32, i32) {
    %c0_i32 = arith.constant 0 : i32
    %c0_i32_0 = arith.constant 0 : i32
    return %arg1, %c0_i32 : i32, i32
  }
  func.func @transform_2(%arg0: i32, %arg1: i32) -> (i32, i32) {
    %c0_i32 = arith.constant 0 : i32
    %c0_i32_0 = arith.constant 0 : i32
    %c0_i32_1 = arith.constant 0 : i32
    return %c0_i32, %c0_i32_0 : i32, i32
  }
  func.func @transform_3(%arg0: i32, %arg1: i32) -> (i32, i32) {
    %c0_i32 = arith.constant 0 : i32
    %c0_i32_0 = arith.constant 0 : i32
    return %arg0, %c0_i32 : i32, i32
  }
}

</mosaic_0001>

<llo_original>
// kernel: tpu_custom_call.1
$region0: #{tpu_custom_call.1}
  #allocation0 [shape = 'u32[]', space=smem, size = 0x4, offset = 0x4, fixed_abs, tag = 'smem constant byte address 0x4 - core index']
  #allocation1 [shape = 'u32[144,128]{1,0:T(1,128)}', space=vmem, size = 0x12000, scoped, tag = 'internal scratch']
  #allocation2 [shape = 'f32[512,64]{1,0:T(8,128)}', space=vmem, size = 0x40000, scoped, tag = 'scratch operand']
  %s0 = inlined_call_operand.hbm [shape: bf16[1024,384], index: 0, kind: input, shape index: {}]
  %s1 = inlined_call_operand.vmem [shape: bf16[384,64], index: 1, kind: input, shape index: {}]
  %s2 = inlined_call_operand.vmem [shape: f32[1,64], index: 2, kind: input, shape index: {}]
  %s3 = inlined_call_operand.vmem [shape: bf16[1024,64], index: 3, kind: output, shape index: {}]
  %s4 = sld [smem:[#allocation0]]
  $region57: #{tpu_custom_call.1} parent=0
    _
  %s6 = ssub.s32 1, %s4
  %s7 = scalar_select 0, %s6, %s4
  $region1: #{tpu_custom_call.1} parent=0
    #allocation3 [shape = 'u8[786432]{0}', space=vmem, size = 0xc0000, scoped, tag = 'input window, operand 0']
    #allocation4 [shape = 's32[2]{0}', space=sflag, size = 0x8, scoped, tag = 'scoped memory for tpu_custom_call.1']
    %8 = vsyncpa [#allocation4], 0
    %s9 = scalar_lea.sflag [#allocation4], 1
    %10 = vsyncpa %s9, 0
    loop: start=0, step=1, limit=4
    $region2: #{tpu_custom_call.1} parent=1 // loop_pre_header
      _
    $region3: #{tpu_custom_call.1} parent=1 // loop_header
      %s12 = sphi 0, %s16
      %p13 = scmp.ge.s32.totalorder %s12, 4
      %s19 = sphi 0, %s31
      %s20 = sphi 0, %s27
      %s21 = sphi 0, %s19
      %s22 = sphi 0, %s20
      %s23 = sphi 0, %s21
      %s24 = sphi 0, %s22
      %s36 = sphi 0, %s38
      %s39 = sphi 0, %s36
      %s40 = sphi 0, %s39
      %s56 = sphi 0, %s40
      %s62 = sphi 0, %s64
      %s65 = sphi 0, %s62
      %s66 = sphi 0, %s65
      %s82 = sphi 0, %s66
      %s86 = sphi 0, %s86
      %s88 = sphi 0, %s86
      %s89 = sphi 0, %s88
      %s103 = sphi 0, %s89
      %s109 = sphi 0, %s111
      %s112 = sphi 0, %s109
      %s113 = sphi 0, %s112
      %s129 = sphi 0, %s113
    $region4: #{tpu_custom_call.1} parent=1 // loop_header_branch
      %15 = sbr.rel (%p13) target = $region8
    $region5: #{tpu_custom_call.1} parent=1 // loop_body
      %s17 = ssub.s32 %s12, 1
      %s18 = ssub.s32 %s12, 2
      %s25 = sadd.s32 1, %s20
      %p26 = scmp.ge.s32.totalorder %s25, 1
      %s27 = scalar_select %p26, 0, %s25
      %s28 = sadd.s32 1, %s19
      %s29 = scalar_select %p26, %s28, %s19
      %p30 = scmp.ge.s32.totalorder %s29, 2
      %s31 = scalar_select %p30, 0, %s29
      %s32 = ssub.s32 %s19, %s31
      %s33 = ssub.s32 %s20, %s27
      %s34 = sor.u32 %s32, %s33
      %p35 = scmp.eq.s32.totalorder %s34, 0
      %s37 = sadd.s32 %s36, 1
      %s38 = scalar_select %p35, %s36, %s37
      %p41 = pneg %p35
      %p42 = scmp.eq.s32.totalorder %s12, 1
      %p43 = por %p41, %p42
      %p44 = scmp.ne.s32.totalorder %s36, %s39
      %p45 = scmp.eq.s32.totalorder %s12, 0
      %p46 = por %p44, %p45
      %p47 = scmp.ne.s32.totalorder %s36, %s39
      %p48 = scmp.eq.s32.totalorder %s17, 1
      %p49 = por %p47, %p48
      %p50 = scmp.ne.s32.totalorder %s39, %s40
      %p51 = scmp.eq.s32.totalorder %s17, 0
      %p52 = por %p50, %p51
      %p53 = scmp.ne.s32.totalorder %s39, %s40
      %p54 = scmp.eq.s32.totalorder %s18, 1
      %p55 = por %p53, %p54
      %p57 = scmp.ne.s32.totalorder %s40, %s56
      %p58 = scmp.eq.s32.totalorder %s18, 0
      %p59 = por %p57, %p58
      %s60 = ssub.s32 %s20, %s27
      %p61 = scmp.eq.s32.totalorder %s60, 0
      %s63 = sadd.s32 %s62, 1
      %s64 = scalar_select %p61, %s62, %s63
      %p67 = pneg %p61
      %p68 = scmp.eq.s32.totalorder %s12, 1
      %p69 = por %p67, %p68
      %p70 = scmp.ne.s32.totalorder %s62, %s65
      %p71 = scmp.eq.s32.totalorder %s12, 0
      %p72 = por %p70, %p71
      %p73 = scmp.ne.s32.totalorder %s62, %s65
      %p74 = scmp.eq.s32.totalorder %s17, 1
      %p75 = por %p73, %p74
      %p76 = scmp.ne.s32.totalorder %s65, %s66
      %p77 = scmp.eq.s32.totalorder %s17, 0
      %p78 = por %p76, %p77
      %p79 = scmp.ne.s32.totalorder %s65, %s66
      %p80 = scmp.eq.s32.totalorder %s18, 1
      %p81 = por %p79, %p80
      %p83 = scmp.ne.s32.totalorder %s66, %s82
      %p84 = scmp.eq.s32.totalorder %s18, 0
      %p85 = por %p83, %p84
      %s87 = sadd.s32 %s86, 1
      %p90 = scmp.eq.s32.totalorder %s12, 1
      %p91 = scmp.ne.s32.totalorder %s86, %s88
      %p92 = scmp.eq.s32.totalorder %s12, 0
      %p93 = por %p91, %p92
      %p94 = scmp.ne.s32.totalorder %s86, %s88
      %p95 = scmp.eq.s32.totalorder %s17, 1
      %p96 = por %p94, %p95
      %p97 = scmp.ne.s32.totalorder %s88, %s89
      %p98 = scmp.eq.s32.totalorder %s17, 0
      %p99 = por %p97, %p98
      %p100 = scmp.ne.s32.totalorder %s88, %s89
      %p101 = scmp.eq.s32.totalorder %s18, 1
      %p102 = por %p100, %p101
      %p104 = scmp.ne.s32.totalorder %s89, %s103
      %p105 = scmp.eq.s32.totalorder %s18, 0
      %p106 = por %p104, %p105
      %s107 = ssub.s32 %s19, %s31
      %p108 = scmp.eq.s32.totalorder %s107, 0
      %s110 = sadd.s32 %s109, 1
      %s111 = scalar_select %p108, %s109, %s110
      %p114 = pneg %p108
      %p115 = scmp.eq.s32.totalorder %s12, 1
      %p116 = por %p114, %p115
      %p117 = scmp.ne.s32.totalorder %s109, %s112
      %p118 = scmp.eq.s32.totalorder %s12, 0
      %p119 = por %p117, %p118
      %p120 = scmp.ne.s32.totalorder %s109, %s112
      %p121 = scmp.eq.s32.totalorder %s17, 1
      %p122 = por %p120, %p121
      %p123 = scmp.ne.s32.totalorder %s112, %s113
      %p124 = scmp.eq.s32.totalorder %s17, 0
      %p125 = por %p123, %p124
      %p126 = scmp.ne.s32.totalorder %s112, %s113
      %p127 = scmp.eq.s32.totalorder %s18, 1
      %p128 = por %p126, %p127
      %p130 = scmp.ne.s32.totalorder %s113, %s129
      %p131 = scmp.eq.s32.totalorder %s18, 0
      %p132 = por %p130, %p131
      %p133 = scmp.le.s32.totalorder 1, %s12
      %p134 = scmp.lt.s32.totalorder %s12, 3
      %p135 = pnand %p133, %p134
      %p136 = pneg %p135
      // Predicated region
      $region9: #{tpu_custom_call.1} parent=5 // pred_check
        _
      $region10: #{tpu_custom_call.1} parent=5 // pred_check_branch
        %138 = sbr.rel (%p135) target = $region12
      $region11: #{tpu_custom_call.1} parent=5 // pred_region
        %s139 = ssub.s32 %s12, 1
        // Predicated region
        $region13: #{tpu_custom_call.1} parent=11 // pred_check
          %p140 = pneg %p78
        $region14: #{tpu_custom_call.1} parent=11 // pred_check_branch
          %142 = sbr.rel (%p140) target = $region16
        $region15: #{tpu_custom_call.1} parent=11 // pred_region
          %s143 = smul.u32 48, %s22
          %p144 = scmp.lt.s32.totalorder %s143, 47
          %s145 = scalar_select %p144, %s143, 47
          %s146 = smul.addr %s145, 4
          %s147 = scalar_lea.vmem %s1, %s146
          %s148 = smul.u32 48, %s22
        $region16: #{tpu_custom_call.1} parent=11 // pred_fallthru
          _
        // Predicated region
        $region17: #{tpu_custom_call.1} parent=11 // pred_check
          %p149 = pneg %p99
        $region18: #{tpu_custom_call.1} parent=11 // pred_check_branch
          %151 = sbr.rel (%p149) target = $region20
        $region19: #{tpu_custom_call.1} parent=11 // pred_region
          _
        $region20: #{tpu_custom_call.1} parent=11 // pred_fallthru
          _
      $region12: #{tpu_custom_call.1} parent=5 // pred_fallthru
        _
      %p152 = scmp.lt.s32.totalorder %s12, 2
      // Predicated region
      $region21: #{tpu_custom_call.1} parent=5 // pred_check
        %p153 = pneg %p152
      $region22: #{tpu_custom_call.1} parent=5 // pred_check_branch
        %155 = sbr.rel (%p153) target = $region24
      $region23: #{tpu_custom_call.1} parent=5 // pred_region
        // Predicated region
        $region25: #{tpu_custom_call.1} parent=23 // pred_check
          %p156 = pneg %p46
        $region26: #{tpu_custom_call.1} parent=23 // pred_check_branch
          %158 = sbr.rel (%p156) target = $region28
        $region27: #{tpu_custom_call.1} parent=23 // pred_region
          %s159 = sand.u32 %s36, 1
          %s160 = scalar_lea.sflag [#allocation4], %s159
          %s161 = sand.u32 %s36, 1
          %s162 = smul.addr %s161, 768
          %s163 = scalar_lea.vmem [#allocation3], %s162
          %s164 = smul.u32 64, %s19
          %s165 = smul.u32 3, %s20
          %s167 = ssub.s32 12288, 12288
          %168 = vsyncadd %s160, %s167
          %s169 = smul.addr %s164, 3
          %s170 = sadd.s32 %s165, %s169
          %s171 = smul.addr %s170, 64
          %s172 = scalar_lea.hbm %s0, %s171
          %s173 = sshll.u32 %s163, 4
          %s174 = int_to_ptr.vmem [resolvable:$true] %s173
          %179 = dma.hbm_to_vmem [thread:$0]  %s172, 12288, %s174, %s160, 192, 192, 12
        $region28: #{tpu_custom_call.1} parent=23 // pred_fallthru
          _
      $region24: #{tpu_custom_call.1} parent=5 // pred_fallthru
        _
      %p180 = scmp.le.s32.totalorder 1, %s12
      %p181 = scmp.lt.s32.totalorder %s12, 3
      %p182 = pnand %p180, %p181
      %p183 = pneg %p182
      // Predicated region
      $region29: #{tpu_custom_call.1} parent=5 // pred_check
        _
      $region30: #{tpu_custom_call.1} parent=5 // pred_check_branch
        %185 = sbr.rel (%p182) target = $region32
      $region31: #{tpu_custom_call.1} parent=5 // pred_region
        %s186 = ssub.s32 %s12, 1
        %s187 = sand.u32 %s39, 1
        %s188 = scalar_lea.sflag [#allocation4], %s187
        %s189 = sand.u32 %s39, 1
        %s190 = smul.addr %s189, 768
        %s191 = scalar_lea.vmem [#allocation3], %s190
        // Predicated region
        $region33: #{tpu_custom_call.1} parent=31 // pred_check
          %p192 = pneg %p52
        $region34: #{tpu_custom_call.1} parent=31 // pred_check_branch
          %194 = sbr.rel (%p192) target = $region36
        $region35: #{tpu_custom_call.1} parent=31 // pred_region
          %195 = dma.done %s188, 12288
        $region36: #{tpu_custom_call.1} parent=31 // pred_fallthru
          _
        %s196 = sand.u32 %s39, 1
        %s197 = scalar_lea.sflag [#allocation4], %s196
        %s198 = sand.u32 %s39, 1
        %s199 = smul.addr %s198, 768
        %s200 = scalar_lea.vmem [#allocation3], %s199
        %p201 = pneg %p52
        %p202 = pneg %p49
        %s203 = smul.u32 48, %s22
        %p204 = scmp.lt.s32.totalorder %s203, 47
        %s205 = scalar_select %p204, %s203, 47
        %s206 = smul.addr %s205, 4
        %s207 = scalar_lea.vmem %s1, %s206
        %p208 = pneg %p78
        %p209 = pneg %p75
        %p210 = pneg %p99
        %p211 = pneg %p96
        %p212 = pneg %p125
        %p213 = pneg %p122
        %s214 = smul.u32 64, %s21
        %p215 = scmp.lt.s32.totalorder %s214, 127
        %s216 = scalar_select %p215, %s214, 127
        %s217 = smul.addr %s216, 4
        %s218 = scalar_lea.vmem %s3, %s217
        %s219 = smul.u32 64, %s21
        %s220 = smul.u32 3, %s22
        %s221 = smul.u32 48, %s22
        %p222 = scmp.lt.s32.totalorder %s221, 47
        %s223 = scalar_select %p222, %s221, 47
        %s224 = smul.addr %s223, 4
        %s225 = scalar_lea.vmem %s1, %s224
        %s226 = smul.u32 48, %s22
        %s227 = smul.u32 64, %s21
        %p228 = scmp.lt.s32.totalorder %s227, 127
        %s229 = scalar_select %p228, %s227, 127
        %s230 = smul.addr %s229, 4
        %s231 = scalar_lea.vmem %s3, %s230
        %s232 = smul.u32 64, %s21
        %p234 = scmp.eq.s32.totalorder %s22, 0
        // Predicated region
        $region37: #{tpu_custom_call.1} parent=31 // pred_check
          %p235 = pneg %p234
        $region38: #{tpu_custom_call.1} parent=31 // pred_check_branch
          %237 = sbr.rel (%p235) target = $region40
        $region39: #{tpu_custom_call.1} parent=31 // pred_region
          %vm238 = vcmask 523264
          %239 = vst.msk [vmem:[#allocation2] sm:$0xff] %vm238, 0.0
          %240 = vst.msk [vmem:[#allocation2 + $0x8] sm:$0xff] %vm238, 0.0
          %241 = vst.msk [vmem:[#allocation2 + $0x10] sm:$0xff] %vm238, 0.0
          %242 = vst.msk [vmem:[#allocation2 + $0x18] sm:$0xff] %vm238, 0.0
          %243 = vst.msk [vmem:[#allocation2 + $0x20] sm:$0xff] %vm238, 0.0
          %244 = vst.msk [vmem:[#allocation2 + $0x28] sm:$0xff] %vm238, 0.0
          %245 = vst.msk [vmem:[#allocation2 + $0x30] sm:$0xff] %vm238, 0.0
          %246 = vst.msk [vmem:[#allocation2 + $0x38] sm:$0xff] %vm238, 0.0
          %247 = vst.msk [vmem:[#allocation2 + $0x40] sm:$0xff] %vm238, 0.0
          %248 = vst.msk [vmem:[#allocation2 + $0x48] sm:$0xff] %vm238, 0.0
          %249 = vst.msk [vmem:[#allocation2 + $0x50] sm:$0xff] %vm238, 0.0
          %250 = vst.msk [vmem:[#allocation2 + $0x58] sm:$0xff] %vm238, 0.0
          %251 = vst.msk [vmem:[#allocation2 + $0x60] sm:$0xff] %vm238, 0.0
          %252 = vst.msk [vmem:[#allocation2 + $0x68] sm:$0xff] %vm238, 0.0
          %253 = vst.msk [vmem:[#allocation2 + $0x70] sm:$0xff] %vm238, 0.0
          %254 = vst.msk [vmem:[#allocation2 + $0x78] sm:$0xff] %vm238, 0.0
          %255 = vst.msk [vmem:[#allocation2 + $0x80] sm:$0xff] %vm238, 0.0
          %256 = vst.msk [vmem:[#allocation2 + $0x88] sm:$0xff] %vm238, 0.0
          %257 = vst.msk [vmem:[#allocation2 + $0x90] sm:$0xff] %vm238, 0.0
          %258 = vst.msk [vmem:[#allocation2 + $0x98] sm:$0xff] %vm238, 0.0
          %259 = vst.msk [vmem:[#allocation2 + $0xa0] sm:$0xff] %vm238, 0.0
          %260 = vst.msk [vmem:[#allocation2 + $0xa8] sm:$0xff] %vm238, 0.0
          %261 = vst.msk [vmem:[#allocation2 + $0xb0] sm:$0xff] %vm238, 0.0
          %262 = vst.msk [vmem:[#allocation2 + $0xb8] sm:$0xff] %vm238, 0.0
          %263 = vst.msk [vmem:[#allocation2 + $0xc0] sm:$0xff] %vm238, 0.0
          %264 = vst.msk [vmem:[#allocation2 + $0xc8] sm:$0xff] %vm238, 0.0
          %265 = vst.msk [vmem:[#allocation2 + $0xd0] sm:$0xff] %vm238, 0.0
          %266 = vst.msk [vmem:[#allocation2 + $0xd8] sm:$0xff] %vm238, 0.0
          %267 = vst.msk [vmem:[#allocation2 + $0xe0] sm:$0xff] %vm238, 0.0
          %268 = vst.msk [vmem:[#allocation2 + $0xe8] sm:$0xff] %vm238, 0.0
          %269 = vst.msk [vmem:[#allocation2 + $0xf0] sm:$0xff] %vm238, 0.0
          %270 = vst.msk [vmem:[#allocation2 + $0xf8] sm:$0xff] %vm238, 0.0
          %271 = vst.msk [vmem:[#allocation2 + $0x100] sm:$0xff] %vm238, 0.0
          %272 = vst.msk [vmem:[#allocation2 + $0x108] sm:$0xff] %vm238, 0.0
          %273 = vst.msk [vmem:[#allocation2 + $0x110] sm:$0xff] %vm238, 0.0
          %274 = vst.msk [vmem:[#allocation2 + $0x118] sm:$0xff] %vm238, 0.0
          %275 = vst.msk [vmem:[#allocation2 + $0x120] sm:$0xff] %vm238, 0.0
          %276 = vst.msk [vmem:[#allocation2 + $0x128] sm:$0xff] %vm238, 0.0
          %277 = vst.msk [vmem:[#allocation2 + $0x130] sm:$0xff] %vm238, 0.0
          %278 = vst.msk [vmem:[#allocation2 + $0x138] sm:$0xff] %vm238, 0.0
          %279 = vst.msk [vmem:[#allocation2 + $0x140] sm:$0xff] %vm238, 0.0
          %280 = vst.msk [vmem:[#allocation2 + $0x148] sm:$0xff] %vm238, 0.0
          %281 = vst.msk [vmem:[#allocation2 + $0x150] sm:$0xff] %vm238, 0.0
          %282 = vst.msk [vmem:[#allocation2 + $0x158] sm:$0xff] %vm238, 0.0
          %283 = vst.msk [vmem:[#allocation2 + $0x160] sm:$0xff] %vm238, 0.0
          %284 = vst.msk [vmem:[#allocation2 + $0x168] sm:$0xff] %vm238, 0.0
          %285 = vst.msk [vmem:[#allocation2 + $0x170] sm:$0xff] %vm238, 0.0
          %286 = vst.msk [vmem:[#allocation2 + $0x178] sm:$0xff] %vm238, 0.0
          %287 = vst.msk [vmem:[#allocation2 + $0x180] sm:$0xff] %vm238, 0.0
          %288 = vst.msk [vmem:[#allocation2 + $0x188] sm:$0xff] %vm238, 0.0
          %289 = vst.msk [vmem:[#allocation2 + $0x190] sm:$0xff] %vm238, 0.0
          %290 = vst.msk [vmem:[#allocation2 + $0x198] sm:$0xff] %vm238, 0.0
          %291 = vst.msk [vmem:[#allocation2 + $0x1a0] sm:$0xff] %vm238, 0.0
          %292 = vst.msk [vmem:[#allocation2 + $0x1a8] sm:$0xff] %vm238, 0.0
          %293 = vst.msk [vmem:[#allocation2 + $0x1b0] sm:$0xff] %vm238, 0.0
          %294 = vst.msk [vmem:[#allocation2 + $0x1b8] sm:$0xff] %vm238, 0.0
          %295 = vst.msk [vmem:[#allocation2 + $0x1c0] sm:$0xff] %vm238, 0.0
          %296 = vst.msk [vmem:[#allocation2 + $0x1c8] sm:$0xff] %vm238, 0.0
          %297 = vst.msk [vmem:[#allocation2 + $0x1d0] sm:$0xff] %vm238, 0.0
          %298 = vst.msk [vmem:[#allocation2 + $0x1d8] sm:$0xff] %vm238, 0.0
          %299 = vst.msk [vmem:[#allocation2 + $0x1e0] sm:$0xff] %vm238, 0.0
          %300 = vst.msk [vmem:[#allocation2 + $0x1e8] sm:$0xff] %vm238, 0.0
          %301 = vst.msk [vmem:[#allocation2 + $0x1f0] sm:$0xff] %vm238, 0.0
          %302 = vst.msk [vmem:[#allocation2 + $0x1f8] sm:$0xff] %vm238, 0.0
        $region40: #{tpu_custom_call.1} parent=31 // pred_fallthru
          _
        %v303 = vld [vmem:[#allocation2] sm:$0xff]
        %v304 = vld [vmem:[#allocation2 + $0x8] sm:$0xff]
        %v305 = vld [vmem:[#allocation2 + $0x10] sm:$0xff]
        %v306 = vld [vmem:[#allocation2 + $0x18] sm:$0xff]
        %v307 = vld [vmem:[#allocation2 + $0x20] sm:$0xff]
        %v308 = vld [vmem:[#allocation2 + $0x28] sm:$0xff]
        %v309 = vld [vmem:[#allocation2 + $0x30] sm:$0xff]
        %v310 = vld [vmem:[#allocation2 + $0x38] sm:$0xff]
        %v311 = vld [vmem:[#allocation2 + $0x40] sm:$0xff]
        %v312 = vld [vmem:[#allocation2 + $0x48] sm:$0xff]
        %v313 = vld [vmem:[#allocation2 + $0x50] sm:$0xff]
        %v314 = vld [vmem:[#allocation2 + $0x58] sm:$0xff]
        %v315 = vld [vmem:[#allocation2 + $0x60] sm:$0xff]
        %v316 = vld [vmem:[#allocation2 + $0x68] sm:$0xff]
        %v317 = vld [vmem:[#allocation2 + $0x70] sm:$0xff]
        %v318 = vld [vmem:[#allocation2 + $0x78] sm:$0xff]
        %v319 = vld [vmem:[#allocation2 + $0x80] sm:$0xff]
        %v320 = vld [vmem:[#allocation2 + $0x88] sm:$0xff]
        %v321 = vld [vmem:[#allocation2 + $0x90] sm:$0xff]
        %v322 = vld [vmem:[#allocation2 + $0x98] sm:$0xff]
        %v323 = vld [vmem:[#allocation2 + $0xa0] sm:$0xff]
        %v324 = vld [vmem:[#allocation2 + $0xa8] sm:$0xff]
        %v325 = vld [vmem:[#allocation2 + $0xb0] sm:$0xff]
        %v326 = vld [vmem:[#allocation2 + $0xb8] sm:$0xff]
        %v327 = vld [vmem:[#allocation2 + $0xc0] sm:$0xff]
        %v328 = vld [vmem:[#allocation2 + $0xc8] sm:$0xff]
        %v329 = vld [vmem:[#allocation2 + $0xd0] sm:$0xff]
        %v330 = vld [vmem:[#allocation2 + $0xd8] sm:$0xff]
        %v331 = vld [vmem:[#allocation2 + $0xe0] sm:$0xff]
        %v332 = vld [vmem:[#allocation2 + $0xe8] sm:$0xff]
        %v333 = vld [vmem:[#allocation2 + $0xf0] sm:$0xff]
        %v334 = vld [vmem:[#allocation2 + $0xf8] sm:$0xff]
        %v335 = vld [vmem:[#allocation2 + $0x100] sm:$0xff]
        %v336 = vld [vmem:[#allocation2 + $0x108] sm:$0xff]
        %v337 = vld [vmem:[#allocation2 + $0x110] sm:$0xff]
        %v338 = vld [vmem:[#allocation2 + $0x118] sm:$0xff]
        %v339 = vld [vmem:[#allocation2 + $0x120] sm:$0xff]
        %v340 = vld [vmem:[#allocation2 + $0x128] sm:$0xff]
        %v341 = vld [vmem:[#allocation2 + $0x130] sm:$0xff]
        %v342 = vld [vmem:[#allocation2 + $0x138] sm:$0xff]
        %v343 = vld [vmem:[#allocation2 + $0x140] sm:$0xff]
        %v344 = vld [vmem:[#allocation2 + $0x148] sm:$0xff]
        %v345 = vld [vmem:[#allocation2 + $0x150] sm:$0xff]
        %v346 = vld [vmem:[#allocation2 + $0x158] sm:$0xff]
        %v347 = vld [vmem:[#allocation2 + $0x160] sm:$0xff]
        %v348 = vld [vmem:[#allocation2 + $0x168] sm:$0xff]
        %v349 = vld [vmem:[#allocation2 + $0x170] sm:$0xff]
        %v350 = vld [vmem:[#allocation2 + $0x178] sm:$0xff]
        %v351 = vld [vmem:[#allocation2 + $0x180] sm:$0xff]
        %v352 = vld [vmem:[#allocation2 + $0x188] sm:$0xff]
        %v353 = vld [vmem:[#allocation2 + $0x190] sm:$0xff]
        %v354 = vld [vmem:[#allocation2 + $0x198] sm:$0xff]
        %v355 = vld [vmem:[#allocation2 + $0x1a0] sm:$0xff]
        %v356 = vld [vmem:[#allocation2 + $0x1a8] sm:$0xff]
        %v357 = vld [vmem:[#allocation2 + $0x1b0] sm:$0xff]
        %v358 = vld [vmem:[#allocation2 + $0x1b8] sm:$0xff]
        %v359 = vld [vmem:[#allocation2 + $0x1c0] sm:$0xff]
        %v360 = vld [vmem:[#allocation2 + $0x1c8] sm:$0xff]
        %v361 = vld [vmem:[#allocation2 + $0x1d0] sm:$0xff]
        %v362 = vld [vmem:[#allocation2 + $0x1d8] sm:$0xff]
        %v363 = vld [vmem:[#allocation2 + $0x1e0] sm:$0xff]
        %v364 = vld [vmem:[#allocation2 + $0x1e8] sm:$0xff]
        %v365 = vld [vmem:[#allocation2 + $0x1f0] sm:$0xff]
        %v366 = vld [vmem:[#allocation2 + $0x1f8] sm:$0xff]
        %v367 = vld [vmem:[%s191] sm:$0xff]
        %v368 = vld [vmem:[%s191 + $0x8] sm:$0xf]
        %v369 = vld [vmem:[%s191 + $0xc] sm:$0xff]
        %v370 = vld [vmem:[%s191 + $0x14] sm:$0xf]
        %v371 = vld [vmem:[%s191 + $0x18] sm:$0xff]
        %v372 = vld [vmem:[%s191 + $0x20] sm:$0xf]
        %v373 = vld [vmem:[%s191 + $0x24] sm:$0xff]
        %v374 = vld [vmem:[%s191 + $0x2c] sm:$0xf]
        %v375 = vld [vmem:[%s191 + $0x30] sm:$0xff]
        %v376 = vld [vmem:[%s191 + $0x38] sm:$0xf]
        %v377 = vld [vmem:[%s191 + $0x3c] sm:$0xff]
        %v378 = vld [vmem:[%s191 + $0x44] sm:$0xf]
        %v379 = vld [vmem:[%s191 + $0x48] sm:$0xff]
        %v380 = vld [vmem:[%s191 + $0x50] sm:$0xf]
        %v381 = vld [vmem:[%s191 + $0x54] sm:$0xff]
        %v382 = vld [vmem:[%s191 + $0x5c] sm:$0xf]
        %v383 = vld [vmem:[%s191 + $0x60] sm:$0xff]
        %v384 = vld [vmem:[%s191 + $0x68] sm:$0xf]
        %v385 = vld [vmem:[%s191 + $0x6c] sm:$0xff]
        %v386 = vld [vmem:[%s191 + $0x74] sm:$0xf]
        %v387 = vld [vmem:[%s191 + $0x78] sm:$0xff]
        %v388 = vld [vmem:[%s191 + $0x80] sm:$0xf]
        %v389 = vld [vmem:[%s191 + $0x84] sm:$0xff]
        %v390 = vld [vmem:[%s191 + $0x8c] sm:$0xf]
        %v391 = vld [vmem:[%s191 + $0x90] sm:$0xff]
        %v392 = vld [vmem:[%s191 + $0x98] sm:$0xf]
        %v393 = vld [vmem:[%s191 + $0x9c] sm:$0xff]
        %v394 = vld [vmem:[%s191 + $0xa4] sm:$0xf]
        %v395 = vld [vmem:[%s191 + $0xa8] sm:$0xff]
        %v396 = vld [vmem:[%s191 + $0xb0] sm:$0xf]
        %v397 = vld [vmem:[%s191 + $0xb4] sm:$0xff]
        %v398 = vld [vmem:[%s191 + $0xbc] sm:$0xf]
        %v399 = vld [vmem:[%s191 + $0xc0] sm:$0xff]
        %v400 = vld [vmem:[%s191 + $0xc8] sm:$0xf]
        %v401 = vld [vmem:[%s191 + $0xcc] sm:$0xff]
        %v402 = vld [vmem:[%s191 + $0xd4] sm:$0xf]
        %v403 = vld [vmem:[%s191 + $0xd8] sm:$0xff]
        %v404 = vld [vmem:[%s191 + $0xe0] sm:$0xf]
        %v405 = vld [vmem:[%s191 + $0xe4] sm:$0xff]
        %v406 = vld [vmem:[%s191 + $0xec] sm:$0xf]
        %v407 = vld [vmem:[%s191 + $0xf0] sm:$0xff]
        %v408 = vld [vmem:[%s191 + $0xf8] sm:$0xf]
        %v409 = vld [vmem:[%s191 + $0xfc] sm:$0xff]
        %v410 = vld [vmem:[%s191 + $0x104] sm:$0xf]
        %v411 = vld [vmem:[%s191 + $0x108] sm:$0xff]
        %v412 = vld [vmem:[%s191 + $0x110] sm:$0xf]
        %v413 = vld [vmem:[%s191 + $0x114] sm:$0xff]
        %v414 = vld [vmem:[%s191 + $0x11c] sm:$0xf]
        %v415 = vld [vmem:[%s191 + $0x120] sm:$0xff]
        %v416 = vld [vmem:[%s191 + $0x128] sm:$0xf]
        %v417 = vld [vmem:[%s191 + $0x12c] sm:$0xff]
        %v418 = vld [vmem:[%s191 + $0x134] sm:$0xf]
        %v419 = vld [vmem:[%s191 + $0x138] sm:$0xff]
        %v420 = vld [vmem:[%s191 + $0x140] sm:$0xf]
        %v421 = vld [vmem:[%s191 + $0x144] sm:$0xff]
        %v422 = vld [vmem:[%s191 + $0x14c] sm:$0xf]
        %v423 = vld [vmem:[%s191 + $0x150] sm:$0xff]
        %v424 = vld [vmem:[%s191 + $0x158] sm:$0xf]
        %v425 = vld [vmem:[%s191 + $0x15c] sm:$0xff]
        %v426 = vld [vmem:[%s191 + $0x164] sm:$0xf]
        %v427 = vld [vmem:[%s191 + $0x168] sm:$0xff]
        %v428 = vld [vmem:[%s191 + $0x170] sm:$0xf]
        %v429 = vld [vmem:[%s191 + $0x174] sm:$0xff]
        %v430 = vld [vmem:[%s191 + $0x17c] sm:$0xf]
        %v431 = vld [vmem:[%s191 + $0x180] sm:$0xff]
        %v432 = vld [vmem:[%s191 + $0x188] sm:$0xf]
        %v433 = vld [vmem:[%s191 + $0x18c] sm:$0xff]
        %v434 = vld [vmem:[%s191 + $0x194] sm:$0xf]
        %v435 = vld [vmem:[%s191 + $0x198] sm:$0xff]
        %v436 = vld [vmem:[%s191 + $0x1a0] sm:$0xf]
        %v437 = vld [vmem:[%s191 + $0x1a4] sm:$0xff]
        %v438 = vld [vmem:[%s191 + $0x1ac] sm:$0xf]
        %v439 = vld [vmem:[%s191 + $0x1b0] sm:$0xff]
        %v440 = vld [vmem:[%s191 + $0x1b8] sm:$0xf]
        %v441 = vld [vmem:[%s191 + $0x1bc] sm:$0xff]
        %v442 = vld [vmem:[%s191 + $0x1c4] sm:$0xf]
        %v443 = vld [vmem:[%s191 + $0x1c8] sm:$0xff]
        %v444 = vld [vmem:[%s191 + $0x1d0] sm:$0xf]
        %v445 = vld [vmem:[%s191 + $0x1d4] sm:$0xff]
        %v446 = vld [vmem:[%s191 + $0x1dc] sm:$0xf]
        %v447 = vld [vmem:[%s191 + $0x1e0] sm:$0xff]
        %v448 = vld [vmem:[%s191 + $0x1e8] sm:$0xf]
        %v449 = vld [vmem:[%s191 + $0x1ec] sm:$0xff]
        %v450 = vld [vmem:[%s191 + $0x1f4] sm:$0xf]
        %v451 = vld [vmem:[%s191 + $0x1f8] sm:$0xff]
        %v452 = vld [vmem:[%s191 + $0x200] sm:$0xf]
        %v453 = vld [vmem:[%s191 + $0x204] sm:$0xff]
        %v454 = vld [vmem:[%s191 + $0x20c] sm:$0xf]
        %v455 = vld [vmem:[%s191 + $0x210] sm:$0xff]
        %v456 = vld [vmem:[%s191 + $0x218] sm:$0xf]
        %v457 = vld [vmem:[%s191 + $0x21c] sm:$0xff]
        %v458 = vld [vmem:[%s191 + $0x224] sm:$0xf]
        %v459 = vld [vmem:[%s191 + $0x228] sm:$0xff]
        %v460 = vld [vmem:[%s191 + $0x230] sm:$0xf]
        %v461 = vld [vmem:[%s191 + $0x234] sm:$0xff]
        %v462 = vld [vmem:[%s191 + $0x23c] sm:$0xf]
        %v463 = vld [vmem:[%s191 + $0x240] sm:$0xff]
        %v464 = vld [vmem:[%s191 + $0x248] sm:$0xf]
        %v465 = vld [vmem:[%s191 + $0x24c] sm:$0xff]
        %v466 = vld [vmem:[%s191 + $0x254] sm:$0xf]
        %v467 = vld [vmem:[%s191 + $0x258] sm:$0xff]
        %v468 = vld [vmem:[%s191 + $0x260] sm:$0xf]
        %v469 = vld [vmem:[%s191 + $0x264] sm:$0xff]
        %v470 = vld [vmem:[%s191 + $0x26c] sm:$0xf]
        %v471 = vld [vmem:[%s191 + $0x270] sm:$0xff]
        %v472 = vld [vmem:[%s191 + $0x278] sm:$0xf]
        %v473 = vld [vmem:[%s191 + $0x27c] sm:$0xff]
        %v474 = vld [vmem:[%s191 + $0x284] sm:$0xf]
        %v475 = vld [vmem:[%s191 + $0x288] sm:$0xff]
        %v476 = vld [vmem:[%s191 + $0x290] sm:$0xf]
        %v477 = vld [vmem:[%s191 + $0x294] sm:$0xff]
        %v478 = vld [vmem:[%s191 + $0x29c] sm:$0xf]
        %v479 = vld [vmem:[%s191 + $0x2a0] sm:$0xff]
        %v480 = vld [vmem:[%s191 + $0x2a8] sm:$0xf]
        %v481 = vld [vmem:[%s191 + $0x2ac] sm:$0xff]
        %v482 = vld [vmem:[%s191 + $0x2b4] sm:$0xf]
        %v483 = vld [vmem:[%s191 + $0x2b8] sm:$0xff]
        %v484 = vld [vmem:[%s191 + $0x2c0] sm:$0xf]
        %v485 = vld [vmem:[%s191 + $0x2c4] sm:$0xff]
        %v486 = vld [vmem:[%s191 + $0x2cc] sm:$0xf]
        %v487 = vld [vmem:[%s191 + $0x2d0] sm:$0xff]
        %v488 = vld [vmem:[%s191 + $0x2d8] sm:$0xf]
        %v489 = vld [vmem:[%s191 + $0x2dc] sm:$0xff]
        %v490 = vld [vmem:[%s191 + $0x2e4] sm:$0xf]
        %v491 = vld [vmem:[%s191 + $0x2e8] sm:$0xff]
        %v492 = vld [vmem:[%s191 + $0x2f0] sm:$0xf]
        %v493 = vld [vmem:[%s191 + $0x2f4] sm:$0xff]
        %v494 = vld [vmem:[%s191 + $0x2fc] sm:$0xf]
        %v495 = vld [vmem:[%s225] sm:$0xf]
        %v496 = vld [vmem:[%s225 + $0x4] sm:$0xf]
        %v497 = vld [vmem:[%s225 + $0x8] sm:$0xf]
        %v498 = vld [vmem:[%s225 + $0xc] sm:$0xf]
        %v499 = vld [vmem:[%s225 + $0x10] sm:$0xf]
        %v500 = vld [vmem:[%s225 + $0x14] sm:$0xf]
        %v501 = vld [vmem:[%s225 + $0x18] sm:$0xf]
        %v502 = vld [vmem:[%s225 + $0x1c] sm:$0xf]
        %v503 = vld [vmem:[%s225 + $0x20] sm:$0xf]
        %v504 = vld [vmem:[%s225 + $0x24] sm:$0xf]
        %v505 = vld [vmem:[%s225 + $0x28] sm:$0xf]
        %v506 = vld [vmem:[%s225 + $0x2c] sm:$0xf]
        %v507 = vld [vmem:[%s225 + $0x30] sm:$0xf]
        %v508 = vld [vmem:[%s225 + $0x34] sm:$0xf]
        %v509 = vld [vmem:[%s225 + $0x38] sm:$0xf]
        %v510 = vld [vmem:[%s225 + $0x3c] sm:$0xf]
        %v511 = vld [vmem:[%s225 + $0x40] sm:$0xf]
        %v512 = vld [vmem:[%s225 + $0x44] sm:$0xf]
        %v513 = vld [vmem:[%s225 + $0x48] sm:$0xf]
        %v514 = vld [vmem:[%s225 + $0x4c] sm:$0xf]
        %v515 = vld [vmem:[%s225 + $0x50] sm:$0xf]
        %v516 = vld [vmem:[%s225 + $0x54] sm:$0xf]
        %v517 = vld [vmem:[%s225 + $0x58] sm:$0xf]
        %v518 = vld [vmem:[%s225 + $0x5c] sm:$0xf]
        %v519 = vld [vmem:[%s225 + $0x60] sm:$0xf]
        %v520 = vld [vmem:[%s225 + $0x64] sm:$0xf]
        %v521 = vld [vmem:[%s225 + $0x68] sm:$0xf]
        %v522 = vld [vmem:[%s225 + $0x6c] sm:$0xf]
        %v523 = vld [vmem:[%s225 + $0x70] sm:$0xf]
        %v524 = vld [vmem:[%s225 + $0x74] sm:$0xf]
        %v525 = vld [vmem:[%s225 + $0x78] sm:$0xf]
        %v526 = vld [vmem:[%s225 + $0x7c] sm:$0xf]
        %v527 = vld [vmem:[%s225 + $0x80] sm:$0xf]
        %v528 = vld [vmem:[%s225 + $0x84] sm:$0xf]
        %v529 = vld [vmem:[%s225 + $0x88] sm:$0xf]
        %v530 = vld [vmem:[%s225 + $0x8c] sm:$0xf]
        %v531 = vld [vmem:[%s225 + $0x90] sm:$0xf]
        %v532 = vld [vmem:[%s225 + $0x94] sm:$0xf]
        %v533 = vld [vmem:[%s225 + $0x98] sm:$0xf]
        %v534 = vld [vmem:[%s225 + $0x9c] sm:$0xf]
        %v535 = vld [vmem:[%s225 + $0xa0] sm:$0xf]
        %v536 = vld [vmem:[%s225 + $0xa4] sm:$0xf]
        %v537 = vld [vmem:[%s225 + $0xa8] sm:$0xf]
        %v538 = vld [vmem:[%s225 + $0xac] sm:$0xf]
        %v539 = vld [vmem:[%s225 + $0xb0] sm:$0xf]
        %v540 = vld [vmem:[%s225 + $0xb4] sm:$0xf]
        %v541 = vld [vmem:[%s225 + $0xb8] sm:$0xf]
        %v542 = vld [vmem:[%s225 + $0xbc] sm:$0xf]
        %v671 = vunpack.c.l.b16 %v367
        %v672 = vunpack.c.h.b16 %v367
        %v673 = vunpack.c.l.b16 %v368
        %v674 = vunpack.c.l.b16 %v369
        %v675 = vunpack.c.h.b16 %v369
        %v676 = vunpack.c.l.b16 %v370
        %v677 = vunpack.c.l.b16 %v371
        %v678 = vunpack.c.h.b16 %v371
        %v679 = vunpack.c.l.b16 %v372
        %v680 = vunpack.c.l.b16 %v373
        %v681 = vunpack.c.h.b16 %v373
        %v682 = vunpack.c.l.b16 %v374
        %v683 = vunpack.c.l.b16 %v375
        %v684 = vunpack.c.h.b16 %v375
        %v685 = vunpack.c.l.b16 %v376
        %v686 = vunpack.c.l.b16 %v377
        %v687 = vunpack.c.h.b16 %v377
        %v688 = vunpack.c.l.b16 %v378
        %v689 = vunpack.c.l.b16 %v379
        %v690 = vunpack.c.h.b16 %v379
        %v691 = vunpack.c.l.b16 %v380
        %v692 = vunpack.c.l.b16 %v381
        %v693 = vunpack.c.h.b16 %v381
        %v694 = vunpack.c.l.b16 %v382
        %v695 = vunpack.c.l.b16 %v383
        %v696 = vunpack.c.h.b16 %v383
        %v697 = vunpack.c.l.b16 %v384
        %v698 = vunpack.c.l.b16 %v385
        %v699 = vunpack.c.h.b16 %v385
        %v700 = vunpack.c.l.b16 %v386
        %v701 = vunpack.c.l.b16 %v387
        %v702 = vunpack.c.h.b16 %v387
        %v703 = vunpack.c.l.b16 %v388
        %v704 = vunpack.c.l.b16 %v389
        %v705 = vunpack.c.h.b16 %v389
        %v706 = vunpack.c.l.b16 %v390
        %v707 = vunpack.c.l.b16 %v391
        %v708 = vunpack.c.h.b16 %v391
        %v709 = vunpack.c.l.b16 %v392
        %v710 = vunpack.c.l.b16 %v393
        %v711 = vunpack.c.h.b16 %v393
        %v712 = vunpack.c.l.b16 %v394
        %v713 = vunpack.c.l.b16 %v395
        %v714 = vunpack.c.h.b16 %v395
        %v715 = vunpack.c.l.b16 %v396
        %v716 = vunpack.c.l.b16 %v397
        %v717 = vunpack.c.h.b16 %v397
        %v718 = vunpack.c.l.b16 %v398
        %v719 = vunpack.c.l.b16 %v399
        %v720 = vunpack.c.h.b16 %v399
        %v721 = vunpack.c.l.b16 %v400
        %v722 = vunpack.c.l.b16 %v401
        %v723 = vunpack.c.h.b16 %v401
        %v724 = vunpack.c.l.b16 %v402
        %v725 = vunpack.c.l.b16 %v403
        %v726 = vunpack.c.h.b16 %v403
        %v727 = vunpack.c.l.b16 %v404
        %v728 = vunpack.c.l.b16 %v405
        %v729 = vunpack.c.h.b16 %v405
        %v730 = vunpack.c.l.b16 %v406
        %v731 = vunpack.c.l.b16 %v407
        %v732 = vunpack.c.h.b16 %v407
        %v733 = vunpack.c.l.b16 %v408
        %v734 = vunpack.c.l.b16 %v409
        %v735 = vunpack.c.h.b16 %v409
        %v736 = vunpack.c.l.b16 %v410
        %v737 = vunpack.c.l.b16 %v411
        %v738 = vunpack.c.h.b16 %v411
        %v739 = vunpack.c.l.b16 %v412
        %v740 = vunpack.c.l.b16 %v413
        %v741 = vunpack.c.h.b16 %v413
        %v742 = vunpack.c.l.b16 %v414
        %v743 = vunpack.c.l.b16 %v415
        %v744 = vunpack.c.h.b16 %v415
        %v745 = vunpack.c.l.b16 %v416
        %v746 = vunpack.c.l.b16 %v417
        %v747 = vunpack.c.h.b16 %v417
        %v748 = vunpack.c.l.b16 %v418
        %v749 = vunpack.c.l.b16 %v419
        %v750 = vunpack.c.h.b16 %v419
        %v751 = vunpack.c.l.b16 %v420
        %v752 = vunpack.c.l.b16 %v421
        %v753 = vunpack.c.h.b16 %v421
        %v754 = vunpack.c.l.b16 %v422
        %v755 = vunpack.c.l.b16 %v423
        %v756 = vunpack.c.h.b16 %v423
        %v757 = vunpack.c.l.b16 %v424
        %v758 = vunpack.c.l.b16 %v425
        %v759 = vunpack.c.h.b16 %v425
        %v760 = vunpack.c.l.b16 %v426
        %v761 = vunpack.c.l.b16 %v427
        %v762 = vunpack.c.h.b16 %v427
        %v763 = vunpack.c.l.b16 %v428
        %v764 = vunpack.c.l.b16 %v429
        %v765 = vunpack.c.h.b16 %v429
        %v766 = vunpack.c.l.b16 %v430
        %v767 = vunpack.c.l.b16 %v431
        %v768 = vunpack.c.h.b16 %v431
        %v769 = vunpack.c.l.b16 %v432
        %v770 = vunpack.c.l.b16 %v433
        %v771 = vunpack.c.h.b16 %v433
        %v772 = vunpack.c.l.b16 %v434
        %v773 = vunpack.c.l.b16 %v435
        %v774 = vunpack.c.h.b16 %v435
        %v775 = vunpack.c.l.b16 %v436
        %v776 = vunpack.c.l.b16 %v437
        %v777 = vunpack.c.h.b16 %v437
        %v778 = vunpack.c.l.b16 %v438
        %v779 = vunpack.c.l.b16 %v439
        %v780 = vunpack.c.h.b16 %v439
        %v781 = vunpack.c.l.b16 %v440
        %v782 = vunpack.c.l.b16 %v441
        %v783 = vunpack.c.h.b16 %v441
        %v784 = vunpack.c.l.b16 %v442
        %v785 = vunpack.c.l.b16 %v443
        %v786 = vunpack.c.h.b16 %v443
        %v787 = vunpack.c.l.b16 %v444
        %v788 = vunpack.c.l.b16 %v445
        %v789 = vunpack.c.h.b16 %v445
        %v790 = vunpack.c.l.b16 %v446
        %v791 = vunpack.c.l.b16 %v447
        %v792 = vunpack.c.h.b16 %v447
        %v793 = vunpack.c.l.b16 %v448
        %v794 = vunpack.c.l.b16 %v449
        %v795 = vunpack.c.h.b16 %v449
        %v796 = vunpack.c.l.b16 %v450
        %v797 = vunpack.c.l.b16 %v451
        %v798 = vunpack.c.h.b16 %v451
        %v799 = vunpack.c.l.b16 %v452
        %v800 = vunpack.c.l.b16 %v453
        %v801 = vunpack.c.h.b16 %v453
        %v802 = vunpack.c.l.b16 %v454
        %v803 = vunpack.c.l.b16 %v455
        %v804 = vunpack.c.h.b16 %v455
        %v805 = vunpack.c.l.b16 %v456
        %v806 = vunpack.c.l.b16 %v457
        %v807 = vunpack.c.h.b16 %v457
        %v808 = vunpack.c.l.b16 %v458
        %v809 = vunpack.c.l.b16 %v459
        %v810 = vunpack.c.h.b16 %v459
        %v811 = vunpack.c.l.b16 %v460
        %v812 = vunpack.c.l.b16 %v461
        %v813 = vunpack.c.h.b16 %v461
        %v814 = vunpack.c.l.b16 %v462
        %v815 = vunpack.c.l.b16 %v463
        %v816 = vunpack.c.h.b16 %v463
        %v817 = vunpack.c.l.b16 %v464
        %v818 = vunpack.c.l.b16 %v465
        %v819 = vunpack.c.h.b16 %v465
        %v820 = vunpack.c.l.b16 %v466
        %v821 = vunpack.c.l.b16 %v467
        %v822 = vunpack.c.h.b16 %v467
        %v823 = vunpack.c.l.b16 %v468
        %v824 = vunpack.c.l.b16 %v469
        %v825 = vunpack.c.h.b16 %v469
        %v826 = vunpack.c.l.b16 %v470
        %v827 = vunpack.c.l.b16 %v471
        %v828 = vunpack.c.h.b16 %v471
        %v829 = vunpack.c.l.b16 %v472
        %v830 = vunpack.c.l.b16 %v473
        %v831 = vunpack.c.h.b16 %v473
        %v832 = vunpack.c.l.b16 %v474
        %v833 = vunpack.c.l.b16 %v475
        %v834 = vunpack.c.h.b16 %v475
        %v835 = vunpack.c.l.b16 %v476
        %v836 = vunpack.c.l.b16 %v477
        %v837 = vunpack.c.h.b16 %v477
        %v838 = vunpack.c.l.b16 %v478
        %v839 = vunpack.c.l.b16 %v479
        %v840 = vunpack.c.h.b16 %v479
        %v841 = vunpack.c.l.b16 %v480
        %v842 = vunpack.c.l.b16 %v481
        %v843 = vunpack.c.h.b16 %v481
        %v844 = vunpack.c.l.b16 %v482
        %v845 = vunpack.c.l.b16 %v483
        %v846 = vunpack.c.h.b16 %v483
        %v847 = vunpack.c.l.b16 %v484
        %v848 = vunpack.c.l.b16 %v485
        %v849 = vunpack.c.h.b16 %v485
        %v850 = vunpack.c.l.b16 %v486
        %v851 = vunpack.c.l.b16 %v487
        %v852 = vunpack.c.h.b16 %v487
        %v853 = vunpack.c.l.b16 %v488
        %v854 = vunpack.c.l.b16 %v489
        %v855 = vunpack.c.h.b16 %v489
        %v856 = vunpack.c.l.b16 %v490
        %v857 = vunpack.c.l.b16 %v491
        %v858 = vunpack.c.h.b16 %v491
        %v859 = vunpack.c.l.b16 %v492
        %v860 = vunpack.c.l.b16 %v493
        %v861 = vunpack.c.h.b16 %v493
        %v862 = vunpack.c.l.b16 %v494
        %v863 = vpack.c.b16 %v674, %v671
        %v864 = vpack.c.b16 %v675, %v672
        %v865 = vpack.c.b16 %v676, %v673
        %v866 = vpack.c.b16 %v680, %v677
        %v867 = vpack.c.b16 %v681, %v678
        %v868 = vpack.c.b16 %v682, %v679
        %v869 = vpack.c.b16 %v686, %v683
        %v870 = vpack.c.b16 %v687, %v684
        %v871 = vpack.c.b16 %v688, %v685
        %v872 = vpack.c.b16 %v692, %v689
        %v873 = vpack.c.b16 %v693, %v690
        %v874 = vpack.c.b16 %v694, %v691
        %v875 = vpack.c.b16 %v698, %v695
        %v876 = vpack.c.b16 %v699, %v696
        %v877 = vpack.c.b16 %v700, %v697
        %v878 = vpack.c.b16 %v704, %v701
        %v879 = vpack.c.b16 %v705, %v702
        %v880 = vpack.c.b16 %v706, %v703
        %v881 = vpack.c.b16 %v710, %v707
        %v882 = vpack.c.b16 %v711, %v708
        %v883 = vpack.c.b16 %v712, %v709
        %v884 = vpack.c.b16 %v716, %v713
        %v885 = vpack.c.b16 %v717, %v714
        %v886 = vpack.c.b16 %v718, %v715
        %v887 = vpack.c.b16 %v722, %v719
        %v888 = vpack.c.b16 %v723, %v720
        %v889 = vpack.c.b16 %v724, %v721
        %v890 = vpack.c.b16 %v728, %v725
        %v891 = vpack.c.b16 %v729, %v726
        %v892 = vpack.c.b16 %v730, %v727
        %v893 = vpack.c.b16 %v734, %v731
        %v894 = vpack.c.b16 %v735, %v732
        %v895 = vpack.c.b16 %v736, %v733
        %v896 = vpack.c.b16 %v740, %v737
        %v897 = vpack.c.b16 %v741, %v738
        %v898 = vpack.c.b16 %v742, %v739
        %v899 = vpack.c.b16 %v746, %v743
        %v900 = vpack.c.b16 %v747, %v744
        %v901 = vpack.c.b16 %v748, %v745
        %v902 = vpack.c.b16 %v752, %v749
        %v903 = vpack.c.b16 %v753, %v750
        %v904 = vpack.c.b16 %v754, %v751
        %v905 = vpack.c.b16 %v758, %v755
        %v906 = vpack.c.b16 %v759, %v756
        %v907 = vpack.c.b16 %v760, %v757
        %v908 = vpack.c.b16 %v764, %v761
        %v909 = vpack.c.b16 %v765, %v762
        %v910 = vpack.c.b16 %v766, %v763
        %v911 = vpack.c.b16 %v770, %v767
        %v912 = vpack.c.b16 %v771, %v768
        %v913 = vpack.c.b16 %v772, %v769
        %v914 = vpack.c.b16 %v776, %v773
        %v915 = vpack.c.b16 %v777, %v774
        %v916 = vpack.c.b16 %v778, %v775
        %v917 = vpack.c.b16 %v782, %v779
        %v918 = vpack.c.b16 %v783, %v780
        %v919 = vpack.c.b16 %v784, %v781
        %v920 = vpack.c.b16 %v788, %v785
        %v921 = vpack.c.b16 %v789, %v786
        %v922 = vpack.c.b16 %v790, %v787
        %v923 = vpack.c.b16 %v794, %v791
        %v924 = vpack.c.b16 %v795, %v792
        %v925 = vpack.c.b16 %v796, %v793
        %v926 = vpack.c.b16 %v800, %v797
        %v927 = vpack.c.b16 %v801, %v798
        %v928 = vpack.c.b16 %v802, %v799
        %v929 = vpack.c.b16 %v806, %v803
        %v930 = vpack.c.b16 %v807, %v804
        %v931 = vpack.c.b16 %v808, %v805
        %v932 = vpack.c.b16 %v812, %v809
        %v933 = vpack.c.b16 %v813, %v810
        %v934 = vpack.c.b16 %v814, %v811
        %v935 = vpack.c.b16 %v818, %v815
        %v936 = vpack.c.b16 %v819, %v816
        %v937 = vpack.c.b16 %v820, %v817
        %v938 = vpack.c.b16 %v824, %v821
        %v939 = vpack.c.b16 %v825, %v822
        %v940 = vpack.c.b16 %v826, %v823
        %v941 = vpack.c.b16 %v830, %v827
        %v942 = vpack.c.b16 %v831, %v828
        %v943 = vpack.c.b16 %v832, %v829
        %v944 = vpack.c.b16 %v836, %v833
        %v945 = vpack.c.b16 %v837, %v834
        %v946 = vpack.c.b16 %v838, %v835
        %v947 = vpack.c.b16 %v842, %v839
        %v948 = vpack.c.b16 %v843, %v840
        %v949 = vpack.c.b16 %v844, %v841
        %v950 = vpack.c.b16 %v848, %v845
        %v951 = vpack.c.b16 %v849, %v846
        %v952 = vpack.c.b16 %v850, %v847
        %v953 = vpack.c.b16 %v854, %v851
        %v954 = vpack.c.b16 %v855, %v852
        %v955 = vpack.c.b16 %v856, %v853
        %v956 = vpack.c.b16 %v860, %v857
        %v957 = vpack.c.b16 %v861, %v858
        %v958 = vpack.c.b16 %v862, %v859
        %v1103 = vunpack.c.l.b16 %v495
        %v1104 = vunpack.c.l.b16 %v496
        %v1105 = vunpack.c.l.b16 %v497
        %v1106 = vunpack.c.l.b16 %v498
        %v1107 = vunpack.c.l.b16 %v499
        %v1108 = vunpack.c.l.b16 %v500
        %v1109 = vunpack.c.l.b16 %v501
        %v1110 = vunpack.c.l.b16 %v502
        %v1111 = vunpack.c.l.b16 %v503
        %v1112 = vunpack.c.l.b16 %v504
        %v1113 = vunpack.c.l.b16 %v505
        %v1114 = vunpack.c.l.b16 %v506
        %v1115 = vunpack.c.l.b16 %v507
        %v1116 = vunpack.c.l.b16 %v508
        %v1117 = vunpack.c.l.b16 %v509
        %v1118 = vunpack.c.l.b16 %v510
        %v1119 = vunpack.c.l.b16 %v511
        %v1120 = vunpack.c.l.b16 %v512
        %v1121 = vunpack.c.l.b16 %v513
        %v1122 = vunpack.c.l.b16 %v514
        %v1123 = vunpack.c.l.b16 %v515
        %v1124 = vunpack.c.l.b16 %v516
        %v1125 = vunpack.c.l.b16 %v517
        %v1126 = vunpack.c.l.b16 %v518
        %v1127 = vunpack.c.l.b16 %v519
        %v1128 = vunpack.c.l.b16 %v520
        %v1129 = vunpack.c.l.b16 %v521
        %v1130 = vunpack.c.l.b16 %v522
        %v1131 = vunpack.c.l.b16 %v523
        %v1132 = vunpack.c.l.b16 %v524
        %v1133 = vunpack.c.l.b16 %v525
        %v1134 = vunpack.c.l.b16 %v526
        %v1135 = vunpack.c.l.b16 %v527
        %v1136 = vunpack.c.l.b16 %v528
        %v1137 = vunpack.c.l.b16 %v529
        %v1138 = vunpack.c.l.b16 %v530
        %v1139 = vunpack.c.l.b16 %v531
        %v1140 = vunpack.c.l.b16 %v532
        %v1141 = vunpack.c.l.b16 %v533
        %v1142 = vunpack.c.l.b16 %v534
        %v1143 = vunpack.c.l.b16 %v535
        %v1144 = vunpack.c.l.b16 %v536
        %v1145 = vunpack.c.l.b16 %v537
        %v1146 = vunpack.c.l.b16 %v538
        %v1147 = vunpack.c.l.b16 %v539
        %v1148 = vunpack.c.l.b16 %v540
        %v1149 = vunpack.c.l.b16 %v541
        %v1150 = vunpack.c.l.b16 %v542
        %v1151 = vpack.c.b16 %v1104, %v1103
        %v1152 = vpack.c.b16 %v1106, %v1105
        %v1153 = vpack.c.b16 %v1108, %v1107
        %v1154 = vpack.c.b16 %v1110, %v1109
        %v1155 = vpack.c.b16 %v1112, %v1111
        %v1156 = vpack.c.b16 %v1114, %v1113
        %v1157 = vpack.c.b16 %v1116, %v1115
        %v1158 = vpack.c.b16 %v1118, %v1117
        %v1159 = vpack.c.b16 %v1120, %v1119
        %v1160 = vpack.c.b16 %v1122, %v1121
        %v1161 = vpack.c.b16 %v1124, %v1123
        %v1162 = vpack.c.b16 %v1126, %v1125
        %v1163 = vpack.c.b16 %v1128, %v1127
        %v1164 = vpack.c.b16 %v1130, %v1129
        %v1165 = vpack.c.b16 %v1132, %v1131
        %v1166 = vpack.c.b16 %v1134, %v1133
        %v1167 = vpack.c.b16 %v1136, %v1135
        %v1168 = vpack.c.b16 %v1138, %v1137
        %v1169 = vpack.c.b16 %v1140, %v1139
        %v1170 = vpack.c.b16 %v1142, %v1141
        %v1171 = vpack.c.b16 %v1144, %v1143
        %v1172 = vpack.c.b16 %v1146, %v1145
        %v1173 = vpack.c.b16 %v1148, %v1147
        %v1174 = vpack.c.b16 %v1150, %v1149
        %1199 = vmatprep.subr.bf16.mxu0 0
        %1200 = vmatpush1.bf16.msra.mxu0 %v1158
        %1201 = vmatprep.subr.bf16.mxu0 0
        %1202 = vmatpush1.bf16.msra.mxu0 %v1157
        %1203 = vmatprep.subr.bf16.mxu0 0
        %1204 = vmatpush1.bf16.msra.mxu0 %v1156
        %1205 = vmatprep.subr.bf16.mxu0 0
        %1206 = vmatpush1.bf16.msra.mxu0 %v1155
        %1207 = vmatprep.subr.bf16.mxu0 0
        %1208 = vmatpush1.bf16.msra.mxu0 %v1154
        %1209 = vmatprep.subr.bf16.mxu0 0
        %1210 = vmatpush1.bf16.msra.mxu0 %v1153
        %1211 = vmatprep.subr.bf16.mxu0 0
        %1212 = vmatpush1.bf16.msra.mxu0 %v1152
        %1213 = vmatprep.subr.bf16.mxu0 0
        %1214 = vmatpush1.bf16.msra.mxu0 %v1151
        %1215 = vmatprep.subr.bf16.mxu0 0
        %1216 = vmatpush2.bf16.msra.mxu0 %v1166
        %1217 = vmatprep.subr.bf16.mxu0 0
        %1218 = vmatpush2.bf16.msra.mxu0 %v1165
        %1219 = vmatprep.subr.bf16.mxu0 0
        %1220 = vmatpush2.bf16.msra.mxu0 %v1164
        %1221 = vmatprep.subr.bf16.mxu0 0
        %1222 = vmatpush2.bf16.msra.mxu0 %v1163
        %1223 = vmatprep.subr.bf16.mxu0 0
        %1224 = vmatpush2.bf16.msra.mxu0 %v1162
        %1225 = vmatprep.subr.bf16.mxu0 0
        %1226 = vmatpush2.bf16.msra.mxu0 %v1161
        %1227 = vmatprep.subr.bf16.mxu0 0
        %1228 = vmatpush2.bf16.msra.mxu0 %v1160
        %1229 = vmatprep.subr.bf16.mxu0 0
        %1230 = vmatpush2.bf16.msra.mxu0 %v1159
        %1231 = vmatprep.mubr.bf16.mxu0 %v864
        %1232 = vmatmul.mubr.bf16.gmra.mxu0 %v863
        %v1233 = vpop.f32.mrf.mxu0
        %v1234 = vadd.f32 0.0, %v1233
        %v1235 = vpop.f32.mrf.mxu0
        %v1236 = vpop.f32.mrf.mxu0
        %v1237 = vadd.f32 0.0, %v1236
        %v1238 = vpop.f32.mrf.mxu0
        %1239 = vmatprep.mubr.bf16.mxu0 %v867
        %1240 = vmatmul.mubr.bf16.gmra.mxu0 %v866
        %v1241 = vpop.f32.mrf.mxu0
        %v1242 = vadd.f32 0.0, %v1241
        %v1243 = vpop.f32.mrf.mxu0
        %v1244 = vpop.f32.mrf.mxu0
        %v1245 = vadd.f32 0.0, %v1244
        %v1246 = vpop.f32.mrf.mxu0
        %1247 = vmatprep.mubr.bf16.mxu0 %v870
        %1248 = vmatmul.mubr.bf16.gmra.mxu0 %v869
        %v1249 = vpop.f32.mrf.mxu0
        %v1250 = vadd.f32 0.0, %v1249
        %v1251 = vpop.f32.mrf.mxu0
        %v1252 = vpop.f32.mrf.mxu0
        %v1253 = vadd.f32 0.0, %v1252
        %v1254 = vpop.f32.mrf.mxu0
        %1255 = vmatprep.mubr.bf16.mxu0 %v873
        %1256 = vmatmul.mubr.bf16.gmra.mxu0 %v872
        %v1257 = vpop.f32.mrf.mxu0
        %v1258 = vadd.f32 0.0, %v1257
        %v1259 = vpop.f32.mrf.mxu0
        %v1260 = vpop.f32.mrf.mxu0
        %v1261 = vadd.f32 0.0, %v1260
        %v1262 = vpop.f32.mrf.mxu0
        %1263 = vmatprep.mubr.bf16.mxu0 %v876
        %1264 = vmatmul.mubr.bf16.gmra.mxu0 %v875
        %v1265 = vpop.f32.mrf.mxu0
        %v1266 = vadd.f32 0.0, %v1265
        %v1267 = vpop.f32.mrf.mxu0
        %v1268 = vpop.f32.mrf.mxu0
        %v1269 = vadd.f32 0.0, %v1268
        %v1270 = vpop.f32.mrf.mxu0
        %1271 = vmatprep.mubr.bf16.mxu0 %v879
        %1272 = vmatmul.mubr.bf16.gmra.mxu0 %v878
        %v1273 = vpop.f32.mrf.mxu0
        %v1274 = vadd.f32 0.0, %v1273
        %v1275 = vpop.f32.mrf.mxu0
        %v1276 = vpop.f32.mrf.mxu0
        %v1277 = vadd.f32 0.0, %v1276
        %v1278 = vpop.f32.mrf.mxu0
        %1279 = vmatprep.mubr.bf16.mxu0 %v882
        %1280 = vmatmul.mubr.bf16.gmra.mxu0 %v881
        %v1281 = vpop.f32.mrf.mxu0
        %v1282 = vadd.f32 0.0, %v1281
        %v1283 = vpop.f32.mrf.mxu0
        %v1284 = vpop.f32.mrf.mxu0
        %v1285 = vadd.f32 0.0, %v1284
        %v1286 = vpop.f32.mrf.mxu0
        %1287 = vmatprep.mubr.bf16.mxu0 %v885
        %1288 = vmatmul.mubr.bf16.gmra.mxu0 %v884
        %v1289 = vpop.f32.mrf.mxu0
        %v1290 = vadd.f32 0.0, %v1289
        %v1291 = vpop.f32.mrf.mxu0
        %v1292 = vpop.f32.mrf.mxu0
        %v1293 = vadd.f32 0.0, %v1292
        %v1294 = vpop.f32.mrf.mxu0
        %1295 = vmatprep.mubr.bf16.mxu0 %v888
        %1296 = vmatmul.mubr.bf16.gmra.mxu0 %v887
        %v1297 = vpop.f32.mrf.mxu0
        %v1298 = vadd.f32 0.0, %v1297
        %v1299 = vpop.f32.mrf.mxu0
        %v1300 = vpop.f32.mrf.mxu0
        %v1301 = vadd.f32 0.0, %v1300
        %v1302 = vpop.f32.mrf.mxu0
        %1303 = vmatprep.mubr.bf16.mxu0 %v891
        %1304 = vmatmul.mubr.bf16.gmra.mxu0 %v890
        %v1305 = vpop.f32.mrf.mxu0
        %v1306 = vadd.f32 0.0, %v1305
        %v1307 = vpop.f32.mrf.mxu0
        %v1308 = vpop.f32.mrf.mxu0
        %v1309 = vadd.f32 0.0, %v1308
        %v1310 = vpop.f32.mrf.mxu0
        %1311 = vmatprep.mubr.bf16.mxu0 %v894
        %1312 = vmatmul.mubr.bf16.gmra.mxu0 %v893
        %v1313 = vpop.f32.mrf.mxu0
        %v1314 = vadd.f32 0.0, %v1313
        %v1315 = vpop.f32.mrf.mxu0
        %v1316 = vpop.f32.mrf.mxu0
        %v1317 = vadd.f32 0.0, %v1316
        %v1318 = vpop.f32.mrf.mxu0
        %1319 = vmatprep.mubr.bf16.mxu0 %v897
        %1320 = vmatmul.mubr.bf16.gmra.mxu0 %v896
        %v1321 = vpop.f32.mrf.mxu0
        %v1322 = vadd.f32 0.0, %v1321
        %v1323 = vpop.f32.mrf.mxu0
        %v1324 = vpop.f32.mrf.mxu0
        %v1325 = vadd.f32 0.0, %v1324
        %v1326 = vpop.f32.mrf.mxu0
        %1327 = vmatprep.mubr.bf16.mxu0 %v900
        %1328 = vmatmul.mubr.bf16.gmra.mxu0 %v899
        %v1329 = vpop.f32.mrf.mxu0
        %v1330 = vadd.f32 0.0, %v1329
        %v1331 = vpop.f32.mrf.mxu0
        %v1332 = vpop.f32.mrf.mxu0
        %v1333 = vadd.f32 0.0, %v1332
        %v1334 = vpop.f32.mrf.mxu0
        %1335 = vmatprep.mubr.bf16.mxu0 %v903
        %1336 = vmatmul.mubr.bf16.gmra.mxu0 %v902
        %v1337 = vpop.f32.mrf.mxu0
        %v1338 = vadd.f32 0.0, %v1337
        %v1339 = vpop.f32.mrf.mxu0
        %v1340 = vpop.f32.mrf.mxu0
        %v1341 = vadd.f32 0.0, %v1340
        %v1342 = vpop.f32.mrf.mxu0
        %1343 = vmatprep.mubr.bf16.mxu0 %v906
        %1344 = vmatmul.mubr.bf16.gmra.mxu0 %v905
        %v1345 = vpop.f32.mrf.mxu0
        %v1346 = vadd.f32 0.0, %v1345
        %v1347 = vpop.f32.mrf.mxu0
        %v1348 = vpop.f32.mrf.mxu0
        %v1349 = vadd.f32 0.0, %v1348
        %v1350 = vpop.f32.mrf.mxu0
        %1351 = vmatprep.mubr.bf16.mxu0 %v909
        %1352 = vmatmul.mubr.bf16.gmra.mxu0 %v908
        %v1353 = vpop.f32.mrf.mxu0
        %v1354 = vadd.f32 0.0, %v1353
        %v1355 = vpop.f32.mrf.mxu0
        %v1356 = vpop.f32.mrf.mxu0
        %v1357 = vadd.f32 0.0, %v1356
        %v1358 = vpop.f32.mrf.mxu0
        %1359 = vmatprep.mubr.bf16.mxu0 %v912
        %1360 = vmatmul.mubr.bf16.gmra.mxu0 %v911
        %v1361 = vpop.f32.mrf.mxu0
        %v1362 = vadd.f32 0.0, %v1361
        %v1363 = vpop.f32.mrf.mxu0
        %v1364 = vpop.f32.mrf.mxu0
        %v1365 = vadd.f32 0.0, %v1364
        %v1366 = vpop.f32.mrf.mxu0
        %1367 = vmatprep.mubr.bf16.mxu0 %v915
        %1368 = vmatmul.mubr.bf16.gmra.mxu0 %v914
        %v1369 = vpop.f32.mrf.mxu0
        %v1370 = vadd.f32 0.0, %v1369
        %v1371 = vpop.f32.mrf.mxu0
        %v1372 = vpop.f32.mrf.mxu0
        %v1373 = vadd.f32 0.0, %v1372
        %v1374 = vpop.f32.mrf.mxu0
        %1375 = vmatprep.mubr.bf16.mxu0 %v918
        %1376 = vmatmul.mubr.bf16.gmra.mxu0 %v917
        %v1377 = vpop.f32.mrf.mxu0
        %v1378 = vadd.f32 0.0, %v1377
        %v1379 = vpop.f32.mrf.mxu0
        %v1380 = vpop.f32.mrf.mxu0
        %v1381 = vadd.f32 0.0, %v1380
        %v1382 = vpop.f32.mrf.mxu0
        %1383 = vmatprep.mubr.bf16.mxu0 %v921
        %1384 = vmatmul.mubr.bf16.gmra.mxu0 %v920
        %v1385 = vpop.f32.mrf.mxu0
        %v1386 = vadd.f32 0.0, %v1385
        %v1387 = vpop.f32.mrf.mxu0
        %v1388 = vpop.f32.mrf.mxu0
        %v1389 = vadd.f32 0.0, %v1388
        %v1390 = vpop.f32.mrf.mxu0
        %1391 = vmatprep.mubr.bf16.mxu0 %v924
        %1392 = vmatmul.mubr.bf16.gmra.mxu0 %v923
        %v1393 = vpop.f32.mrf.mxu0
        %v1394 = vadd.f32 0.0, %v1393
        %v1395 = vpop.f32.mrf.mxu0
        %v1396 = vpop.f32.mrf.mxu0
        %v1397 = vadd.f32 0.0, %v1396
        %v1398 = vpop.f32.mrf.mxu0
        %1399 = vmatprep.mubr.bf16.mxu0 %v927
        %1400 = vmatmul.mubr.bf16.gmra.mxu0 %v926
        %v1401 = vpop.f32.mrf.mxu0
        %v1402 = vadd.f32 0.0, %v1401
        %v1403 = vpop.f32.mrf.mxu0
        %v1404 = vpop.f32.mrf.mxu0
        %v1405 = vadd.f32 0.0, %v1404
        %v1406 = vpop.f32.mrf.mxu0
        %1407 = vmatprep.mubr.bf16.mxu0 %v930
        %1408 = vmatmul.mubr.bf16.gmra.mxu0 %v929
        %v1409 = vpop.f32.mrf.mxu0
        %v1410 = vadd.f32 0.0, %v1409
        %v1411 = vpop.f32.mrf.mxu0
        %v1412 = vpop.f32.mrf.mxu0
        %v1413 = vadd.f32 0.0, %v1412
        %v1414 = vpop.f32.mrf.mxu0
        %1415 = vmatprep.mubr.bf16.mxu0 %v933
        %1416 = vmatmul.mubr.bf16.gmra.mxu0 %v932
        %v1417 = vpop.f32.mrf.mxu0
        %v1418 = vadd.f32 0.0, %v1417
        %v1419 = vpop.f32.mrf.mxu0
        %v1420 = vpop.f32.mrf.mxu0
        %v1421 = vadd.f32 0.0, %v1420
        %v1422 = vpop.f32.mrf.mxu0
        %1423 = vmatprep.mubr.bf16.mxu0 %v936
        %1424 = vmatmul.mubr.bf16.gmra.mxu0 %v935
        %v1425 = vpop.f32.mrf.mxu0
        %v1426 = vadd.f32 0.0, %v1425
        %v1427 = vpop.f32.mrf.mxu0
        %v1428 = vpop.f32.mrf.mxu0
        %v1429 = vadd.f32 0.0, %v1428
        %v1430 = vpop.f32.mrf.mxu0
        %1431 = vmatprep.mubr.bf16.mxu0 %v939
        %1432 = vmatmul.mubr.bf16.gmra.mxu0 %v938
        %v1433 = vpop.f32.mrf.mxu0
        %v1434 = vadd.f32 0.0, %v1433
        %v1435 = vpop.f32.mrf.mxu0
        %v1436 = vpop.f32.mrf.mxu0
        %v1437 = vadd.f32 0.0, %v1436
        %v1438 = vpop.f32.mrf.mxu0
        %1439 = vmatprep.mubr.bf16.mxu0 %v942
        %1440 = vmatmul.mubr.bf16.gmra.mxu0 %v941
        %v1441 = vpop.f32.mrf.mxu0
        %v1442 = vadd.f32 0.0, %v1441
        %v1443 = vpop.f32.mrf.mxu0
        %v1444 = vpop.f32.mrf.mxu0
        %v1445 = vadd.f32 0.0, %v1444
        %v1446 = vpop.f32.mrf.mxu0
        %1447 = vmatprep.mubr.bf16.mxu0 %v945
        %1448 = vmatmul.mubr.bf16.gmra.mxu0 %v944
        %v1449 = vpop.f32.mrf.mxu0
        %v1450 = vadd.f32 0.0, %v1449
        %v1451 = vpop.f32.mrf.mxu0
        %v1452 = vpop.f32.mrf.mxu0
        %v1453 = vadd.f32 0.0, %v1452
        %v1454 = vpop.f32.mrf.mxu0
        %1455 = vmatprep.mubr.bf16.mxu0 %v948
        %1456 = vmatmul.mubr.bf16.gmra.mxu0 %v947
        %v1457 = vpop.f32.mrf.mxu0
        %v1458 = vadd.f32 0.0, %v1457
        %v1459 = vpop.f32.mrf.mxu0
        %v1460 = vpop.f32.mrf.mxu0
        %v1461 = vadd.f32 0.0, %v1460
        %v1462 = vpop.f32.mrf.mxu0
        %1463 = vmatprep.mubr.bf16.mxu0 %v951
        %1464 = vmatmul.mubr.bf16.gmra.mxu0 %v950
        %v1465 = vpop.f32.mrf.mxu0
        %v1466 = vadd.f32 0.0, %v1465
        %v1467 = vpop.f32.mrf.mxu0
        %v1468 = vpop.f32.mrf.mxu0
        %v1469 = vadd.f32 0.0, %v1468
        %v1470 = vpop.f32.mrf.mxu0
        %1471 = vmatprep.mubr.bf16.mxu0 %v954
        %1472 = vmatmul.mubr.bf16.gmra.mxu0 %v953
        %v1473 = vpop.f32.mrf.mxu0
        %v1474 = vadd.f32 0.0, %v1473
        %v1475 = vpop.f32.mrf.mxu0
        %v1476 = vpop.f32.mrf.mxu0
        %v1477 = vadd.f32 0.0, %v1476
        %v1478 = vpop.f32.mrf.mxu0
        %1479 = vmatprep.mubr.bf16.mxu0 %v957
        %1480 = vmatmul.mubr.bf16.gmra.mxu0 %v956
        %v1481 = vpop.f32.mrf.mxu0
        %v1482 = vadd.f32 0.0, %v1481
        %v1483 = vpop.f32.mrf.mxu0
        %v1484 = vpop.f32.mrf.mxu0
        %v1485 = vadd.f32 0.0, %v1484
        %v1486 = vpop.f32.mrf.mxu0
        %1487 = vdwg.mxu0
        %1488 = vmatprep.subr.bf16.mxu0 0
        %1489 = vmatpush1.bf16.msra.mxu0 %v1174
        %1490 = vmatprep.subr.bf16.mxu0 0
        %1491 = vmatpush1.bf16.msra.mxu0 %v1173
        %1492 = vmatprep.subr.bf16.mxu0 0
        %1493 = vmatpush1.bf16.msra.mxu0 %v1172
        %1494 = vmatprep.subr.bf16.mxu0 0
        %1495 = vmatpush1.bf16.msra.mxu0 %v1171
        %1496 = vmatprep.subr.bf16.mxu0 0
        %1497 = vmatpush1.bf16.msra.mxu0 %v1170
        %1498 = vmatprep.subr.bf16.mxu0 0
        %1499 = vmatpush1.bf16.msra.mxu0 %v1169
        %1500 = vmatprep.subr.bf16.mxu0 0
        %1501 = vmatpush1.bf16.msra.mxu0 %v1168
        %1502 = vmatprep.subr.bf16.mxu0 0
        %1503 = vmatpush1.bf16.msra.mxu0 %v1167
        %1504 = vmatprep.subr.bf16.mxu0 0
        %1505 = vmatpush2.bf16.msra.mxu0 0
        %1506 = vmatprep.subr.bf16.mxu0 0
        %1507 = vmatpush2.bf16.msra.mxu0 0
        %1508 = vmatprep.subr.bf16.mxu0 0
        %1509 = vmatpush2.bf16.msra.mxu0 0
        %1510 = vmatprep.subr.bf16.mxu0 0
        %1511 = vmatpush2.bf16.msra.mxu0 0
        %1512 = vmatprep.subr.bf16.mxu0 0
        %1513 = vmatpush2.bf16.msra.mxu0 0
        %1514 = vmatprep.subr.bf16.mxu0 0
        %1515 = vmatpush2.bf16.msra.mxu0 0
        %1516 = vmatprep.subr.bf16.mxu0 0
        %1517 = vmatpush2.bf16.msra.mxu0 0
        %1518 = vmatprep.subr.bf16.mxu0 0
        %1519 = vmatpush2.bf16.msra.mxu0 0
        %1520 = vmatprep.mubr.bf16.mxu0 0
        %1521 = vmatmul.mubr.bf16.gmra.mxu0 %v865
        %v1522 = vpop.f32.mrf.mxu0
        %v1523 = vadd.f32 %v1234, %v1522
        %v1524 = vpop.f32.mrf.mxu0
        %v1525 = vpop.f32.mrf.mxu0
        %v1526 = vadd.f32 %v1237, %v1525
        %v1527 = vpop.f32.mrf.mxu0
        %1528 = vmatprep.mubr.bf16.mxu0 0
        %1529 = vmatmul.mubr.bf16.gmra.mxu0 %v868
        %v1530 = vpop.f32.mrf.mxu0
        %v1531 = vadd.f32 %v1242, %v1530
        %v1532 = vpop.f32.mrf.mxu0
        %v1533 = vpop.f32.mrf.mxu0
        %v1534 = vadd.f32 %v1245, %v1533
        %v1535 = vpop.f32.mrf.mxu0
        %1536 = vmatprep.mubr.bf16.mxu0 0
        %1537 = vmatmul.mubr.bf16.gmra.mxu0 %v871
        %v1538 = vpop.f32.mrf.mxu0
        %v1539 = vadd.f32 %v1250, %v1538
        %v1540 = vpop.f32.mrf.mxu0
        %v1541 = vpop.f32.mrf.mxu0
        %v1542 = vadd.f32 %v1253, %v1541
        %v1543 = vpop.f32.mrf.mxu0
        %1544 = vmatprep.mubr.bf16.mxu0 0
        %1545 = vmatmul.mubr.bf16.gmra.mxu0 %v874
        %v1546 = vpop.f32.mrf.mxu0
        %v1547 = vadd.f32 %v1258, %v1546
        %v1548 = vpop.f32.mrf.mxu0
        %v1549 = vpop.f32.mrf.mxu0
        %v1550 = vadd.f32 %v1261, %v1549
        %v1551 = vpop.f32.mrf.mxu0
        %1552 = vmatprep.mubr.bf16.mxu0 0
        %1553 = vmatmul.mubr.bf16.gmra.mxu0 %v877
        %v1554 = vpop.f32.mrf.mxu0
        %v1555 = vadd.f32 %v1266, %v1554
        %v1556 = vpop.f32.mrf.mxu0
        %v1557 = vpop.f32.mrf.mxu0
        %v1558 = vadd.f32 %v1269, %v1557
        %v1559 = vpop.f32.mrf.mxu0
        %1560 = vmatprep.mubr.bf16.mxu0 0
        %1561 = vmatmul.mubr.bf16.gmra.mxu0 %v880
        %v1562 = vpop.f32.mrf.mxu0
        %v1563 = vadd.f32 %v1274, %v1562
        %v1564 = vpop.f32.mrf.mxu0
        %v1565 = vpop.f32.mrf.mxu0
        %v1566 = vadd.f32 %v1277, %v1565
        %v1567 = vpop.f32.mrf.mxu0
        %1568 = vmatprep.mubr.bf16.mxu0 0
        %1569 = vmatmul.mubr.bf16.gmra.mxu0 %v883
        %v1570 = vpop.f32.mrf.mxu0
        %v1571 = vadd.f32 %v1282, %v1570
        %v1572 = vpop.f32.mrf.mxu0
        %v1573 = vpop.f32.mrf.mxu0
        %v1574 = vadd.f32 %v1285, %v1573
        %v1575 = vpop.f32.mrf.mxu0
        %1576 = vmatprep.mubr.bf16.mxu0 0
        %1577 = vmatmul.mubr.bf16.gmra.mxu0 %v886
        %v1578 = vpop.f32.mrf.mxu0
        %v1579 = vadd.f32 %v1290, %v1578
        %v1580 = vpop.f32.mrf.mxu0
        %v1581 = vpop.f32.mrf.mxu0
        %v1582 = vadd.f32 %v1293, %v1581
        %v1583 = vpop.f32.mrf.mxu0
        %1584 = vmatprep.mubr.bf16.mxu0 0
        %1585 = vmatmul.mubr.bf16.gmra.mxu0 %v889
        %v1586 = vpop.f32.mrf.mxu0
        %v1587 = vadd.f32 %v1298, %v1586
        %v1588 = vpop.f32.mrf.mxu0
        %v1589 = vpop.f32.mrf.mxu0
        %v1590 = vadd.f32 %v1301, %v1589
        %v1591 = vpop.f32.mrf.mxu0
        %1592 = vmatprep.mubr.bf16.mxu0 0
        %1593 = vmatmul.mubr.bf16.gmra.mxu0 %v892
        %v1594 = vpop.f32.mrf.mxu0
        %v1595 = vadd.f32 %v1306, %v1594
        %v1596 = vpop.f32.mrf.mxu0
        %v1597 = vpop.f32.mrf.mxu0
        %v1598 = vadd.f32 %v1309, %v1597
        %v1599 = vpop.f32.mrf.mxu0
        %1600 = vmatprep.mubr.bf16.mxu0 0
        %1601 = vmatmul.mubr.bf16.gmra.mxu0 %v895
        %v1602 = vpop.f32.mrf.mxu0
        %v1603 = vadd.f32 %v1314, %v1602
        %v1604 = vpop.f32.mrf.mxu0
        %v1605 = vpop.f32.mrf.mxu0
        %v1606 = vadd.f32 %v1317, %v1605
        %v1607 = vpop.f32.mrf.mxu0
        %1608 = vmatprep.mubr.bf16.mxu0 0
        %1609 = vmatmul.mubr.bf16.gmra.mxu0 %v898
        %v1610 = vpop.f32.mrf.mxu0
        %v1611 = vadd.f32 %v1322, %v1610
        %v1612 = vpop.f32.mrf.mxu0
        %v1613 = vpop.f32.mrf.mxu0
        %v1614 = vadd.f32 %v1325, %v1613
        %v1615 = vpop.f32.mrf.mxu0
        %1616 = vmatprep.mubr.bf16.mxu0 0
        %1617 = vmatmul.mubr.bf16.gmra.mxu0 %v901
        %v1618 = vpop.f32.mrf.mxu0
        %v1619 = vadd.f32 %v1330, %v1618
        %v1620 = vpop.f32.mrf.mxu0
        %v1621 = vpop.f32.mrf.mxu0
        %v1622 = vadd.f32 %v1333, %v1621
        %v1623 = vpop.f32.mrf.mxu0
        %1624 = vmatprep.mubr.bf16.mxu0 0
        %1625 = vmatmul.mubr.bf16.gmra.mxu0 %v904
        %v1626 = vpop.f32.mrf.mxu0
        %v1627 = vadd.f32 %v1338, %v1626
        %v1628 = vpop.f32.mrf.mxu0
        %v1629 = vpop.f32.mrf.mxu0
        %v1630 = vadd.f32 %v1341, %v1629
        %v1631 = vpop.f32.mrf.mxu0
        %1632 = vmatprep.mubr.bf16.mxu0 0
        %1633 = vmatmul.mubr.bf16.gmra.mxu0 %v907
        %v1634 = vpop.f32.mrf.mxu0
        %v1635 = vadd.f32 %v1346, %v1634
        %v1636 = vpop.f32.mrf.mxu0
        %v1637 = vpop.f32.mrf.mxu0
        %v1638 = vadd.f32 %v1349, %v1637
        %v1639 = vpop.f32.mrf.mxu0
        %1640 = vmatprep.mubr.bf16.mxu0 0
        %1641 = vmatmul.mubr.bf16.gmra.mxu0 %v910
        %v1642 = vpop.f32.mrf.mxu0
        %v1643 = vadd.f32 %v1354, %v1642
        %v1644 = vpop.f32.mrf.mxu0
        %v1645 = vpop.f32.mrf.mxu0
        %v1646 = vadd.f32 %v1357, %v1645
        %v1647 = vpop.f32.mrf.mxu0
        %1648 = vmatprep.mubr.bf16.mxu0 0
        %1649 = vmatmul.mubr.bf16.gmra.mxu0 %v913
        %v1650 = vpop.f32.mrf.mxu0
        %v1651 = vadd.f32 %v1362, %v1650
        %v1652 = vpop.f32.mrf.mxu0
        %v1653 = vpop.f32.mrf.mxu0
        %v1654 = vadd.f32 %v1365, %v1653
        %v1655 = vpop.f32.mrf.mxu0
        %1656 = vmatprep.mubr.bf16.mxu0 0
        %1657 = vmatmul.mubr.bf16.gmra.mxu0 %v916
        %v1658 = vpop.f32.mrf.mxu0
        %v1659 = vadd.f32 %v1370, %v1658
        %v1660 = vpop.f32.mrf.mxu0
        %v1661 = vpop.f32.mrf.mxu0
        %v1662 = vadd.f32 %v1373, %v1661
        %v1663 = vpop.f32.mrf.mxu0
        %1664 = vmatprep.mubr.bf16.mxu0 0
        %1665 = vmatmul.mubr.bf16.gmra.mxu0 %v919
        %v1666 = vpop.f32.mrf.mxu0
        %v1667 = vadd.f32 %v1378, %v1666
        %v1668 = vpop.f32.mrf.mxu0
        %v1669 = vpop.f32.mrf.mxu0
        %v1670 = vadd.f32 %v1381, %v1669
        %v1671 = vpop.f32.mrf.mxu0
        %1672 = vmatprep.mubr.bf16.mxu0 0
        %1673 = vmatmul.mubr.bf16.gmra.mxu0 %v922
        %v1674 = vpop.f32.mrf.mxu0
        %v1675 = vadd.f32 %v1386, %v1674
        %v1676 = vpop.f32.mrf.mxu0
        %v1677 = vpop.f32.mrf.mxu0
        %v1678 = vadd.f32 %v1389, %v1677
        %v1679 = vpop.f32.mrf.mxu0
        %1680 = vmatprep.mubr.bf16.mxu0 0
        %1681 = vmatmul.mubr.bf16.gmra.mxu0 %v925
        %v1682 = vpop.f32.mrf.mxu0
        %v1683 = vadd.f32 %v1394, %v1682
        %v1684 = vpop.f32.mrf.mxu0
        %v1685 = vpop.f32.mrf.mxu0
        %v1686 = vadd.f32 %v1397, %v1685
        %v1687 = vpop.f32.mrf.mxu0
        %1688 = vmatprep.mubr.bf16.mxu0 0
        %1689 = vmatmul.mubr.bf16.gmra.mxu0 %v928
        %v1690 = vpop.f32.mrf.mxu0
        %v1691 = vadd.f32 %v1402, %v1690
        %v1692 = vpop.f32.mrf.mxu0
        %v1693 = vpop.f32.mrf.mxu0
        %v1694 = vadd.f32 %v1405, %v1693
        %v1695 = vpop.f32.mrf.mxu0
        %1696 = vmatprep.mubr.bf16.mxu0 0
        %1697 = vmatmul.mubr.bf16.gmra.mxu0 %v931
        %v1698 = vpop.f32.mrf.mxu0
        %v1699 = vadd.f32 %v1410, %v1698
        %v1700 = vpop.f32.mrf.mxu0
        %v1701 = vpop.f32.mrf.mxu0
        %v1702 = vadd.f32 %v1413, %v1701
        %v1703 = vpop.f32.mrf.mxu0
        %1704 = vmatprep.mubr.bf16.mxu0 0
        %1705 = vmatmul.mubr.bf16.gmra.mxu0 %v934
        %v1706 = vpop.f32.mrf.mxu0
        %v1707 = vadd.f32 %v1418, %v1706
        %v1708 = vpop.f32.mrf.mxu0
        %v1709 = vpop.f32.mrf.mxu0
        %v1710 = vadd.f32 %v1421, %v1709
        %v1711 = vpop.f32.mrf.mxu0
        %1712 = vmatprep.mubr.bf16.mxu0 0
        %1713 = vmatmul.mubr.bf16.gmra.mxu0 %v937
        %v1714 = vpop.f32.mrf.mxu0
        %v1715 = vadd.f32 %v1426, %v1714
        %v1716 = vpop.f32.mrf.mxu0
        %v1717 = vpop.f32.mrf.mxu0
        %v1718 = vadd.f32 %v1429, %v1717
        %v1719 = vpop.f32.mrf.mxu0
        %1720 = vmatprep.mubr.bf16.mxu0 0
        %1721 = vmatmul.mubr.bf16.gmra.mxu0 %v940
        %v1722 = vpop.f32.mrf.mxu0
        %v1723 = vadd.f32 %v1434, %v1722
        %v1724 = vpop.f32.mrf.mxu0
        %v1725 = vpop.f32.mrf.mxu0
        %v1726 = vadd.f32 %v1437, %v1725
        %v1727 = vpop.f32.mrf.mxu0
        %1728 = vmatprep.mubr.bf16.mxu0 0
        %1729 = vmatmul.mubr.bf16.gmra.mxu0 %v943
        %v1730 = vpop.f32.mrf.mxu0
        %v1731 = vadd.f32 %v1442, %v1730
        %v1732 = vpop.f32.mrf.mxu0
        %v1733 = vpop.f32.mrf.mxu0
        %v1734 = vadd.f32 %v1445, %v1733
        %v1735 = vpop.f32.mrf.mxu0
        %1736 = vmatprep.mubr.bf16.mxu0 0
        %1737 = vmatmul.mubr.bf16.gmra.mxu0 %v946
        %v1738 = vpop.f32.mrf.mxu0
        %v1739 = vadd.f32 %v1450, %v1738
        %v1740 = vpop.f32.mrf.mxu0
        %v1741 = vpop.f32.mrf.mxu0
        %v1742 = vadd.f32 %v1453, %v1741
        %v1743 = vpop.f32.mrf.mxu0
        %1744 = vmatprep.mubr.bf16.mxu0 0
        %1745 = vmatmul.mubr.bf16.gmra.mxu0 %v949
        %v1746 = vpop.f32.mrf.mxu0
        %v1747 = vadd.f32 %v1458, %v1746
        %v1748 = vpop.f32.mrf.mxu0
        %v1749 = vpop.f32.mrf.mxu0
        %v1750 = vadd.f32 %v1461, %v1749
        %v1751 = vpop.f32.mrf.mxu0
        %1752 = vmatprep.mubr.bf16.mxu0 0
        %1753 = vmatmul.mubr.bf16.gmra.mxu0 %v952
        %v1754 = vpop.f32.mrf.mxu0
        %v1755 = vadd.f32 %v1466, %v1754
        %v1756 = vpop.f32.mrf.mxu0
        %v1757 = vpop.f32.mrf.mxu0
        %v1758 = vadd.f32 %v1469, %v1757
        %v1759 = vpop.f32.mrf.mxu0
        %1760 = vmatprep.mubr.bf16.mxu0 0
        %1761 = vmatmul.mubr.bf16.gmra.mxu0 %v955
        %v1762 = vpop.f32.mrf.mxu0
        %v1763 = vadd.f32 %v1474, %v1762
        %v1764 = vpop.f32.mrf.mxu0
        %v1765 = vpop.f32.mrf.mxu0
        %v1766 = vadd.f32 %v1477, %v1765
        %v1767 = vpop.f32.mrf.mxu0
        %1768 = vmatprep.mubr.bf16.mxu0 0
        %1769 = vmatmul.mubr.bf16.gmra.mxu0 %v958
        %v1770 = vpop.f32.mrf.mxu0
        %v1771 = vadd.f32 %v1482, %v1770
        %v1772 = vpop.f32.mrf.mxu0
        %v1773 = vpop.f32.mrf.mxu0
        %v1774 = vadd.f32 %v1485, %v1773
        %v1775 = vpop.f32.mrf.mxu0
        %1776 = vdwg.mxu0
        %v1777 = vadd.f32 %v303, %v1523
        %v1778 = vadd.f32 %v304, %v1526
        %v1779 = vadd.f32 %v305, %v1531
        %v1780 = vadd.f32 %v306, %v1534
        %v1781 = vadd.f32 %v307, %v1539
        %v1782 = vadd.f32 %v308, %v1542
        %v1783 = vadd.f32 %v309, %v1547
        %v1784 = vadd.f32 %v310, %v1550
        %v1785 = vadd.f32 %v311, %v1555
        %v1786 = vadd.f32 %v312, %v1558
        %v1787 = vadd.f32 %v313, %v1563
        %v1788 = vadd.f32 %v314, %v1566
        %v1789 = vadd.f32 %v315, %v1571
        %v1790 = vadd.f32 %v316, %v1574
        %v1791 = vadd.f32 %v317, %v1579
        %v1792 = vadd.f32 %v318, %v1582
        %v1793 = vadd.f32 %v319, %v1587
        %v1794 = vadd.f32 %v320, %v1590
        %v1795 = vadd.f32 %v321, %v1595
        %v1796 = vadd.f32 %v322, %v1598
        %v1797 = vadd.f32 %v323, %v1603
        %v1798 = vadd.f32 %v324, %v1606
        %v1799 = vadd.f32 %v325, %v1611
        %v1800 = vadd.f32 %v326, %v1614
        %v1801 = vadd.f32 %v327, %v1619
        %v1802 = vadd.f32 %v328, %v1622
        %v1803 = vadd.f32 %v329, %v1627
        %v1804 = vadd.f32 %v330, %v1630
        %v1805 = vadd.f32 %v331, %v1635
        %v1806 = vadd.f32 %v332, %v1638
        %v1807 = vadd.f32 %v333, %v1643
        %v1808 = vadd.f32 %v334, %v1646
        %v1809 = vadd.f32 %v335, %v1651
        %v1810 = vadd.f32 %v336, %v1654
        %v1811 = vadd.f32 %v337, %v1659
        %v1812 = vadd.f32 %v338, %v1662
        %v1813 = vadd.f32 %v339, %v1667
        %v1814 = vadd.f32 %v340, %v1670
        %v1815 = vadd.f32 %v341, %v1675
        %v1816 = vadd.f32 %v342, %v1678
        %v1817 = vadd.f32 %v343, %v1683
        %v1818 = vadd.f32 %v344, %v1686
        %v1819 = vadd.f32 %v345, %v1691
        %v1820 = vadd.f32 %v346, %v1694
        %v1821 = vadd.f32 %v347, %v1699
        %v1822 = vadd.f32 %v348, %v1702
        %v1823 = vadd.f32 %v349, %v1707
        %v1824 = vadd.f32 %v350, %v1710
        %v1825 = vadd.f32 %v351, %v1715
        %v1826 = vadd.f32 %v352, %v1718
        %v1827 = vadd.f32 %v353, %v1723
        %v1828 = vadd.f32 %v354, %v1726
        %v1829 = vadd.f32 %v355, %v1731
        %v1830 = vadd.f32 %v356, %v1734
        %v1831 = vadd.f32 %v357, %v1739
        %v1832 = vadd.f32 %v358, %v1742
        %v1833 = vadd.f32 %v359, %v1747
        %v1834 = vadd.f32 %v360, %v1750
        %v1835 = vadd.f32 %v361, %v1755
        %v1836 = vadd.f32 %v362, %v1758
        %v1837 = vadd.f32 %v363, %v1763
        %v1838 = vadd.f32 %v364, %v1766
        %v1839 = vadd.f32 %v365, %v1771
        %v1840 = vadd.f32 %v366, %v1774
        %vm1841 = vcmask 523264
        %1842 = vst.msk [vmem:[#allocation2] sm:$0xff] %vm1841, %v1777
        %1843 = vst.msk [vmem:[#allocation2 + $0x8] sm:$0xff] %vm1841, %v1778
        %1844 = vst.msk [vmem:[#allocation2 + $0x10] sm:$0xff] %vm1841, %v1779
        %1845 = vst.msk [vmem:[#allocation2 + $0x18] sm:$0xff] %vm1841, %v1780
        %1846 = vst.msk [vmem:[#allocation2 + $0x20] sm:$0xff] %vm1841, %v1781
        %1847 = vst.msk [vmem:[#allocation2 + $0x28] sm:$0xff] %vm1841, %v1782
        %1848 = vst.msk [vmem:[#allocation2 + $0x30] sm:$0xff] %vm1841, %v1783
        %1849 = vst.msk [vmem:[#allocation2 + $0x38] sm:$0xff] %vm1841, %v1784
        %1850 = vst.msk [vmem:[#allocation2 + $0x40] sm:$0xff] %vm1841, %v1785
        %1851 = vst.msk [vmem:[#allocation2 + $0x48] sm:$0xff] %vm1841, %v1786
        %1852 = vst.msk [vmem:[#allocation2 + $0x50] sm:$0xff] %vm1841, %v1787
        %1853 = vst.msk [vmem:[#allocation2 + $0x58] sm:$0xff] %vm1841, %v1788
        %1854 = vst.msk [vmem:[#allocation2 + $0x60] sm:$0xff] %vm1841, %v1789
        %1855 = vst.msk [vmem:[#allocation2 + $0x68] sm:$0xff] %vm1841, %v1790
        %1856 = vst.msk [vmem:[#allocation2 + $0x70] sm:$0xff] %vm1841, %v1791
        %1857 = vst.msk [vmem:[#allocation2 + $0x78] sm:$0xff] %vm1841, %v1792
        %1858 = vst.msk [vmem:[#allocation2 + $0x80] sm:$0xff] %vm1841, %v1793
        %1859 = vst.msk [vmem:[#allocation2 + $0x88] sm:$0xff] %vm1841, %v1794
        %1860 = vst.msk [vmem:[#allocation2 + $0x90] sm:$0xff] %vm1841, %v1795
        %1861 = vst.msk [vmem:[#allocation2 + $0x98] sm:$0xff] %vm1841, %v1796
        %1862 = vst.msk [vmem:[#allocation2 + $0xa0] sm:$0xff] %vm1841, %v1797
        %1863 = vst.msk [vmem:[#allocation2 + $0xa8] sm:$0xff] %vm1841, %v1798
        %1864 = vst.msk [vmem:[#allocation2 + $0xb0] sm:$0xff] %vm1841, %v1799
        %1865 = vst.msk [vmem:[#allocation2 + $0xb8] sm:$0xff] %vm1841, %v1800
        %1866 = vst.msk [vmem:[#allocation2 + $0xc0] sm:$0xff] %vm1841, %v1801
        %1867 = vst.msk [vmem:[#allocation2 + $0xc8] sm:$0xff] %vm1841, %v1802
        %1868 = vst.msk [vmem:[#allocation2 + $0xd0] sm:$0xff] %vm1841, %v1803
        %1869 = vst.msk [vmem:[#allocation2 + $0xd8] sm:$0xff] %vm1841, %v1804
        %1870 = vst.msk [vmem:[#allocation2 + $0xe0] sm:$0xff] %vm1841, %v1805
        %1871 = vst.msk [vmem:[#allocation2 + $0xe8] sm:$0xff] %vm1841, %v1806
        %1872 = vst.msk [vmem:[#allocation2 + $0xf0] sm:$0xff] %vm1841, %v1807
        %1873 = vst.msk [vmem:[#allocation2 + $0xf8] sm:$0xff] %vm1841, %v1808
        %1874 = vst.msk [vmem:[#allocation2 + $0x100] sm:$0xff] %vm1841, %v1809
        %1875 = vst.msk [vmem:[#allocation2 + $0x108] sm:$0xff] %vm1841, %v1810
        %1876 = vst.msk [vmem:[#allocation2 + $0x110] sm:$0xff] %vm1841, %v1811
        %1877 = vst.msk [vmem:[#allocation2 + $0x118] sm:$0xff] %vm1841, %v1812
        %1878 = vst.msk [vmem:[#allocation2 + $0x120] sm:$0xff] %vm1841, %v1813
        %1879 = vst.msk [vmem:[#allocation2 + $0x128] sm:$0xff] %vm1841, %v1814
        %1880 = vst.msk [vmem:[#allocation2 + $0x130] sm:$0xff] %vm1841, %v1815
        %1881 = vst.msk [vmem:[#allocation2 + $0x138] sm:$0xff] %vm1841, %v1816
        %1882 = vst.msk [vmem:[#allocation2 + $0x140] sm:$0xff] %vm1841, %v1817
        %1883 = vst.msk [vmem:[#allocation2 + $0x148] sm:$0xff] %vm1841, %v1818
        %1884 = vst.msk [vmem:[#allocation2 + $0x150] sm:$0xff] %vm1841, %v1819
        %1885 = vst.msk [vmem:[#allocation2 + $0x158] sm:$0xff] %vm1841, %v1820
        %1886 = vst.msk [vmem:[#allocation2 + $0x160] sm:$0xff] %vm1841, %v1821
        %1887 = vst.msk [vmem:[#allocation2 + $0x168] sm:$0xff] %vm1841, %v1822
        %1888 = vst.msk [vmem:[#allocation2 + $0x170] sm:$0xff] %vm1841, %v1823
        %1889 = vst.msk [vmem:[#allocation2 + $0x178] sm:$0xff] %vm1841, %v1824
        %1890 = vst.msk [vmem:[#allocation2 + $0x180] sm:$0xff] %vm1841, %v1825
        %1891 = vst.msk [vmem:[#allocation2 + $0x188] sm:$0xff] %vm1841, %v1826
        %1892 = vst.msk [vmem:[#allocation2 + $0x190] sm:$0xff] %vm1841, %v1827
        %1893 = vst.msk [vmem:[#allocation2 + $0x198] sm:$0xff] %vm1841, %v1828
        %1894 = vst.msk [vmem:[#allocation2 + $0x1a0] sm:$0xff] %vm1841, %v1829
        %1895 = vst.msk [vmem:[#allocation2 + $0x1a8] sm:$0xff] %vm1841, %v1830
        %1896 = vst.msk [vmem:[#allocation2 + $0x1b0] sm:$0xff] %vm1841, %v1831
        %1897 = vst.msk [vmem:[#allocation2 + $0x1b8] sm:$0xff] %vm1841, %v1832
        %1898 = vst.msk [vmem:[#allocation2 + $0x1c0] sm:$0xff] %vm1841, %v1833
        %1899 = vst.msk [vmem:[#allocation2 + $0x1c8] sm:$0xff] %vm1841, %v1834
        %1900 = vst.msk [vmem:[#allocation2 + $0x1d0] sm:$0xff] %vm1841, %v1835
        %1901 = vst.msk [vmem:[#allocation2 + $0x1d8] sm:$0xff] %vm1841, %v1836
        %1902 = vst.msk [vmem:[#allocation2 + $0x1e0] sm:$0xff] %vm1841, %v1837
        %1903 = vst.msk [vmem:[#allocation2 + $0x1e8] sm:$0xff] %vm1841, %v1838
        %1904 = vst.msk [vmem:[#allocation2 + $0x1f0] sm:$0xff] %vm1841, %v1839
        %1905 = vst.msk [vmem:[#allocation2 + $0x1f8] sm:$0xff] %vm1841, %v1840
        // Predicated region
        $region41: #{tpu_custom_call.1} parent=31 // pred_check
          %p1906 = pneg %p234
        $region42: #{tpu_custom_call.1} parent=31 // pred_check_branch
          %1908 = sbr.rel (%p1906) target = $region44
        $region43: #{tpu_custom_call.1} parent=31 // pred_region
          %v1909 = vld [vmem:[#allocation2] sm:$0xff]
          %v1910 = vld [vmem:[#allocation2 + $0x8] sm:$0xff]
          %v1911 = vld [vmem:[#allocation2 + $0x10] sm:$0xff]
          %v1912 = vld [vmem:[#allocation2 + $0x18] sm:$0xff]
          %v1913 = vld [vmem:[#allocation2 + $0x20] sm:$0xff]
          %v1914 = vld [vmem:[#allocation2 + $0x28] sm:$0xff]
          %v1915 = vld [vmem:[#allocation2 + $0x30] sm:$0xff]
          %v1916 = vld [vmem:[#allocation2 + $0x38] sm:$0xff]
          %v1917 = vld [vmem:[#allocation2 + $0x40] sm:$0xff]
          %v1918 = vld [vmem:[#allocation2 + $0x48] sm:$0xff]
          %v1919 = vld [vmem:[#allocation2 + $0x50] sm:$0xff]
          %v1920 = vld [vmem:[#allocation2 + $0x58] sm:$0xff]
          %v1921 = vld [vmem:[#allocation2 + $0x60] sm:$0xff]
          %v1922 = vld [vmem:[#allocation2 + $0x68] sm:$0xff]
          %v1923 = vld [vmem:[#allocation2 + $0x70] sm:$0xff]
          %v1924 = vld [vmem:[#allocation2 + $0x78] sm:$0xff]
          %v1925 = vld [vmem:[#allocation2 + $0x80] sm:$0xff]
          %v1926 = vld [vmem:[#allocation2 + $0x88] sm:$0xff]
          %v1927 = vld [vmem:[#allocation2 + $0x90] sm:$0xff]
          %v1928 = vld [vmem:[#allocation2 + $0x98] sm:$0xff]
          %v1929 = vld [vmem:[#allocation2 + $0xa0] sm:$0xff]
          %v1930 = vld [vmem:[#allocation2 + $0xa8] sm:$0xff]
          %v1931 = vld [vmem:[#allocation2 + $0xb0] sm:$0xff]
          %v1932 = vld [vmem:[#allocation2 + $0xb8] sm:$0xff]
          %v1933 = vld [vmem:[#allocation2 + $0xc0] sm:$0xff]
          %v1934 = vld [vmem:[#allocation2 + $0xc8] sm:$0xff]
          %v1935 = vld [vmem:[#allocation2 + $0xd0] sm:$0xff]
          %v1936 = vld [vmem:[#allocation2 + $0xd8] sm:$0xff]
          %v1937 = vld [vmem:[#allocation2 + $0xe0] sm:$0xff]
          %v1938 = vld [vmem:[#allocation2 + $0xe8] sm:$0xff]
          %v1939 = vld [vmem:[#allocation2 + $0xf0] sm:$0xff]
          %v1940 = vld [vmem:[#allocation2 + $0xf8] sm:$0xff]
          %v1941 = vld [vmem:[#allocation2 + $0x100] sm:$0xff]
          %v1942 = vld [vmem:[#allocation2 + $0x108] sm:$0xff]
          %v1943 = vld [vmem:[#allocation2 + $0x110] sm:$0xff]
          %v1944 = vld [vmem:[#allocation2 + $0x118] sm:$0xff]
          %v1945 = vld [vmem:[#allocation2 + $0x120] sm:$0xff]
          %v1946 = vld [vmem:[#allocation2 + $0x128] sm:$0xff]
          %v1947 = vld [vmem:[#allocation2 + $0x130] sm:$0xff]
          %v1948 = vld [vmem:[#allocation2 + $0x138] sm:$0xff]
          %v1949 = vld [vmem:[#allocation2 + $0x140] sm:$0xff]
          %v1950 = vld [vmem:[#allocation2 + $0x148] sm:$0xff]
          %v1951 = vld [vmem:[#allocation2 + $0x150] sm:$0xff]
          %v1952 = vld [vmem:[#allocation2 + $0x158] sm:$0xff]
          %v1953 = vld [vmem:[#allocation2 + $0x160] sm:$0xff]
          %v1954 = vld [vmem:[#allocation2 + $0x168] sm:$0xff]
          %v1955 = vld [vmem:[#allocation2 + $0x170] sm:$0xff]
          %v1956 = vld [vmem:[#allocation2 + $0x178] sm:$0xff]
          %v1957 = vld [vmem:[#allocation2 + $0x180] sm:$0xff]
          %v1958 = vld [vmem:[#allocation2 + $0x188] sm:$0xff]
          %v1959 = vld [vmem:[#allocation2 + $0x190] sm:$0xff]
          %v1960 = vld [vmem:[#allocation2 + $0x198] sm:$0xff]
          %v1961 = vld [vmem:[#allocation2 + $0x1a0] sm:$0xff]
          %v1962 = vld [vmem:[#allocation2 + $0x1a8] sm:$0xff]
          %v1963 = vld [vmem:[#allocation2 + $0x1b0] sm:$0xff]
          %v1964 = vld [vmem:[#allocation2 + $0x1b8] sm:$0xff]
          %v1965 = vld [vmem:[#allocation2 + $0x1c0] sm:$0xff]
          %v1966 = vld [vmem:[#allocation2 + $0x1c8] sm:$0xff]
          %v1967 = vld [vmem:[#allocation2 + $0x1d0] sm:$0xff]
          %v1968 = vld [vmem:[#allocation2 + $0x1d8] sm:$0xff]
          %v1969 = vld [vmem:[#allocation2 + $0x1e0] sm:$0xff]
          %v1970 = vld [vmem:[#allocation2 + $0x1e8] sm:$0xff]
          %v1971 = vld [vmem:[#allocation2 + $0x1f0] sm:$0xff]
          %v1972 = vld [vmem:[#allocation2 + $0x1f8] sm:$0xff]
          %v1973 = vld [vmem:[%s2] sm:$0x1]
          %v1975 = vlaneseq
          %v1976 = vshrl.u32 %v1975, 7
          %v1977 = vsub.s32 0, %v1976
          %v1978 = vrot.slane %v1973, %v1977
          %v1980 = vadd.f32 %v1909, %v1978
          %v1981 = vadd.f32 %v1910, %v1978
          %v1982 = vadd.f32 %v1911, %v1978
          %v1983 = vadd.f32 %v1912, %v1978
          %v1984 = vadd.f32 %v1913, %v1978
          %v1985 = vadd.f32 %v1914, %v1978
          %v1986 = vadd.f32 %v1915, %v1978
          %v1987 = vadd.f32 %v1916, %v1978
          %v1988 = vadd.f32 %v1917, %v1978
          %v1989 = vadd.f32 %v1918, %v1978
          %v1990 = vadd.f32 %v1919, %v1978
          %v1991 = vadd.f32 %v1920, %v1978
          %v1992 = vadd.f32 %v1921, %v1978
          %v1993 = vadd.f32 %v1922, %v1978
          %v1994 = vadd.f32 %v1923, %v1978
          %v1995 = vadd.f32 %v1924, %v1978
          %v1996 = vadd.f32 %v1925, %v1978
          %v1997 = vadd.f32 %v1926, %v1978
          %v1998 = vadd.f32 %v1927, %v1978
          %v1999 = vadd.f32 %v1928, %v1978
          %v2000 = vadd.f32 %v1929, %v1978
          %v2001 = vadd.f32 %v1930, %v1978
          %v2002 = vadd.f32 %v1931, %v1978
          %v2003 = vadd.f32 %v1932, %v1978
          %v2004 = vadd.f32 %v1933, %v1978
          %v2005 = vadd.f32 %v1934, %v1978
          %v2006 = vadd.f32 %v1935, %v1978
          %v2007 = vadd.f32 %v1936, %v1978
          %v2008 = vadd.f32 %v1937, %v1978
          %v2009 = vadd.f32 %v1938, %v1978
          %v2010 = vadd.f32 %v1939, %v1978
          %v2011 = vadd.f32 %v1940, %v1978
          %v2012 = vadd.f32 %v1941, %v1978
          %v2013 = vadd.f32 %v1942, %v1978
          %v2014 = vadd.f32 %v1943, %v1978
          %v2015 = vadd.f32 %v1944, %v1978
          %v2016 = vadd.f32 %v1945, %v1978
          %v2017 = vadd.f32 %v1946, %v1978
          %v2018 = vadd.f32 %v1947, %v1978
          %v2019 = vadd.f32 %v1948, %v1978
          %v2020 = vadd.f32 %v1949, %v1978
          %v2021 = vadd.f32 %v1950, %v1978
          %v2022 = vadd.f32 %v1951, %v1978
          %v2023 = vadd.f32 %v1952, %v1978
          %v2024 = vadd.f32 %v1953, %v1978
          %v2025 = vadd.f32 %v1954, %v1978
          %v2026 = vadd.f32 %v1955, %v1978
          %v2027 = vadd.f32 %v1956, %v1978
          %v2028 = vadd.f32 %v1957, %v1978
          %v2029 = vadd.f32 %v1958, %v1978
          %v2030 = vadd.f32 %v1959, %v1978
          %v2031 = vadd.f32 %v1960, %v1978
          %v2032 = vadd.f32 %v1961, %v1978
          %v2033 = vadd.f32 %v1962, %v1978
          %v2034 = vadd.f32 %v1963, %v1978
          %v2035 = vadd.f32 %v1964, %v1978
          %v2036 = vadd.f32 %v1965, %v1978
          %v2037 = vadd.f32 %v1966, %v1978
          %v2038 = vadd.f32 %v1967, %v1978
          %v2039 = vadd.f32 %v1968, %v1978
          %v2040 = vadd.f32 %v1969, %v1978
          %v2041 = vadd.f32 %v1970, %v1978
          %v2042 = vadd.f32 %v1971, %v1978
          %v2043 = vadd.f32 %v1972, %v1978
          %v2044 = vmax.f32 %v1980, 0.0
          %v2045 = vmax.f32 %v1981, 0.0
          %v2046 = vmax.f32 %v1982, 0.0
          %v2047 = vmax.f32 %v1983, 0.0
          %v2048 = vmax.f32 %v1984, 0.0
          %v2049 = vmax.f32 %v1985, 0.0
          %v2050 = vmax.f32 %v1986, 0.0
          %v2051 = vmax.f32 %v1987, 0.0
          %v2052 = vmax.f32 %v1988, 0.0
          %v2053 = vmax.f32 %v1989, 0.0
          %v2054 = vmax.f32 %v1990, 0.0
          %v2055 = vmax.f32 %v1991, 0.0
          %v2056 = vmax.f32 %v1992, 0.0
          %v2057 = vmax.f32 %v1993, 0.0
          %v2058 = vmax.f32 %v1994, 0.0
          %v2059 = vmax.f32 %v1995, 0.0
          %v2060 = vmax.f32 %v1996, 0.0
          %v2061 = vmax.f32 %v1997, 0.0
          %v2062 = vmax.f32 %v1998, 0.0
          %v2063 = vmax.f32 %v1999, 0.0
          %v2064 = vmax.f32 %v2000, 0.0
          %v2065 = vmax.f32 %v2001, 0.0
          %v2066 = vmax.f32 %v2002, 0.0
          %v2067 = vmax.f32 %v2003, 0.0
          %v2068 = vmax.f32 %v2004, 0.0
          %v2069 = vmax.f32 %v2005, 0.0
          %v2070 = vmax.f32 %v2006, 0.0
          %v2071 = vmax.f32 %v2007, 0.0
          %v2072 = vmax.f32 %v2008, 0.0
          %v2073 = vmax.f32 %v2009, 0.0
          %v2074 = vmax.f32 %v2010, 0.0
          %v2075 = vmax.f32 %v2011, 0.0
          %v2076 = vmax.f32 %v2012, 0.0
          %v2077 = vmax.f32 %v2013, 0.0
          %v2078 = vmax.f32 %v2014, 0.0
          %v2079 = vmax.f32 %v2015, 0.0
          %v2080 = vmax.f32 %v2016, 0.0
          %v2081 = vmax.f32 %v2017, 0.0
          %v2082 = vmax.f32 %v2018, 0.0
          %v2083 = vmax.f32 %v2019, 0.0
          %v2084 = vmax.f32 %v2020, 0.0
          %v2085 = vmax.f32 %v2021, 0.0
          %v2086 = vmax.f32 %v2022, 0.0
          %v2087 = vmax.f32 %v2023, 0.0
          %v2088 = vmax.f32 %v2024, 0.0
          %v2089 = vmax.f32 %v2025, 0.0
          %v2090 = vmax.f32 %v2026, 0.0
          %v2091 = vmax.f32 %v2027, 0.0
          %v2092 = vmax.f32 %v2028, 0.0
          %v2093 = vmax.f32 %v2029, 0.0
          %v2094 = vmax.f32 %v2030, 0.0
          %v2095 = vmax.f32 %v2031, 0.0
          %v2096 = vmax.f32 %v2032, 0.0
          %v2097 = vmax.f32 %v2033, 0.0
          %v2098 = vmax.f32 %v2034, 0.0
          %v2099 = vmax.f32 %v2035, 0.0
          %v2100 = vmax.f32 %v2036, 0.0
          %v2101 = vmax.f32 %v2037, 0.0
          %v2102 = vmax.f32 %v2038, 0.0
          %v2103 = vmax.f32 %v2039, 0.0
          %v2104 = vmax.f32 %v2040, 0.0
          %v2105 = vmax.f32 %v2041, 0.0
          %v2106 = vmax.f32 %v2042, 0.0
          %v2107 = vmax.f32 %v2043, 0.0
          %v2108 = vpack.c.bf16 %v2045, %v2044
          %v2109 = vpack.c.bf16 %v2047, %v2046
          %v2110 = vpack.c.bf16 %v2049, %v2048
          %v2111 = vpack.c.bf16 %v2051, %v2050
          %v2112 = vpack.c.bf16 %v2053, %v2052
          %v2113 = vpack.c.bf16 %v2055, %v2054
          %v2114 = vpack.c.bf16 %v2057, %v2056
          %v2115 = vpack.c.bf16 %v2059, %v2058
          %v2116 = vpack.c.bf16 %v2061, %v2060
          %v2117 = vpack.c.bf16 %v2063, %v2062
          %v2118 = vpack.c.bf16 %v2065, %v2064
          %v2119 = vpack.c.bf16 %v2067, %v2066
          %v2120 = vpack.c.bf16 %v2069, %v2068
          %v2121 = vpack.c.bf16 %v2071, %v2070
          %v2122 = vpack.c.bf16 %v2073, %v2072
          %v2123 = vpack.c.bf16 %v2075, %v2074
          %v2124 = vpack.c.bf16 %v2077, %v2076
          %v2125 = vpack.c.bf16 %v2079, %v2078
          %v2126 = vpack.c.bf16 %v2081, %v2080
          %v2127 = vpack.c.bf16 %v2083, %v2082
          %v2128 = vpack.c.bf16 %v2085, %v2084
          %v2129 = vpack.c.bf16 %v2087, %v2086
          %v2130 = vpack.c.bf16 %v2089, %v2088
          %v2131 = vpack.c.bf16 %v2091, %v2090
          %v2132 = vpack.c.bf16 %v2093, %v2092
          %v2133 = vpack.c.bf16 %v2095, %v2094
          %v2134 = vpack.c.bf16 %v2097, %v2096
          %v2135 = vpack.c.bf16 %v2099, %v2098
          %v2136 = vpack.c.bf16 %v2101, %v2100
          %v2137 = vpack.c.bf16 %v2103, %v2102
          %v2138 = vpack.c.bf16 %v2105, %v2104
          %v2139 = vpack.c.bf16 %v2107, %v2106
          %v2172 = vunpack.c.l.b16 %v2108
          %v2173 = vunpack.c.h.b16 %v2108
          %v2174 = vunpack.c.l.b16 %v2109
          %v2175 = vunpack.c.h.b16 %v2109
          %v2176 = vunpack.c.l.b16 %v2110
          %v2177 = vunpack.c.h.b16 %v2110
          %v2178 = vunpack.c.l.b16 %v2111
          %v2179 = vunpack.c.h.b16 %v2111
          %v2180 = vunpack.c.l.b16 %v2112
          %v2181 = vunpack.c.h.b16 %v2112
          %v2182 = vunpack.c.l.b16 %v2113
          %v2183 = vunpack.c.h.b16 %v2113
          %v2184 = vunpack.c.l.b16 %v2114
          %v2185 = vunpack.c.h.b16 %v2114
          %v2186 = vunpack.c.l.b16 %v2115
          %v2187 = vunpack.c.h.b16 %v2115
          %v2188 = vunpack.c.l.b16 %v2116
          %v2189 = vunpack.c.h.b16 %v2116
          %v2190 = vunpack.c.l.b16 %v2117
          %v2191 = vunpack.c.h.b16 %v2117
          %v2192 = vunpack.c.l.b16 %v2118
          %v2193 = vunpack.c.h.b16 %v2118
          %v2194 = vunpack.c.l.b16 %v2119
          %v2195 = vunpack.c.h.b16 %v2119
          %v2196 = vunpack.c.l.b16 %v2120
          %v2197 = vunpack.c.h.b16 %v2120
          %v2198 = vunpack.c.l.b16 %v2121
          %v2199 = vunpack.c.h.b16 %v2121
          %v2200 = vunpack.c.l.b16 %v2122
          %v2201 = vunpack.c.h.b16 %v2122
          %v2202 = vunpack.c.l.b16 %v2123
          %v2203 = vunpack.c.h.b16 %v2123
          %v2204 = vunpack.c.l.b16 %v2124
          %v2205 = vunpack.c.h.b16 %v2124
          %v2206 = vunpack.c.l.b16 %v2125
          %v2207 = vunpack.c.h.b16 %v2125
          %v2208 = vunpack.c.l.b16 %v2126
          %v2209 = vunpack.c.h.b16 %v2126
          %v2210 = vunpack.c.l.b16 %v2127
          %v2211 = vunpack.c.h.b16 %v2127
          %v2212 = vunpack.c.l.b16 %v2128
          %v2213 = vunpack.c.h.b16 %v2128
          %v2214 = vunpack.c.l.b16 %v2129
          %v2215 = vunpack.c.h.b16 %v2129
          %v2216 = vunpack.c.l.b16 %v2130
          %v2217 = vunpack.c.h.b16 %v2130
          %v2218 = vunpack.c.l.b16 %v2131
          %v2219 = vunpack.c.h.b16 %v2131
          %v2220 = vunpack.c.l.b16 %v2132
          %v2221 = vunpack.c.h.b16 %v2132
          %v2222 = vunpack.c.l.b16 %v2133
          %v2223 = vunpack.c.h.b16 %v2133
          %v2224 = vunpack.c.l.b16 %v2134
          %v2225 = vunpack.c.h.b16 %v2134
          %v2226 = vunpack.c.l.b16 %v2135
          %v2227 = vunpack.c.h.b16 %v2135
          %v2228 = vunpack.c.l.b16 %v2136
          %v2229 = vunpack.c.h.b16 %v2136
          %v2230 = vunpack.c.l.b16 %v2137
          %v2231 = vunpack.c.h.b16 %v2137
          %v2232 = vunpack.c.l.b16 %v2138
          %v2233 = vunpack.c.h.b16 %v2138
          %v2234 = vunpack.c.l.b16 %v2139
          %v2235 = vunpack.c.h.b16 %v2139
          %v2236 = vpack.c.b16 %v2172, %v2172
          %v2237 = vpack.c.b16 %v2173, %v2173
          %v2238 = vpack.c.b16 %v2174, %v2174
          %v2239 = vpack.c.b16 %v2175, %v2175
          %v2240 = vpack.c.b16 %v2176, %v2176
          %v2241 = vpack.c.b16 %v2177, %v2177
          %v2242 = vpack.c.b16 %v2178, %v2178
          %v2243 = vpack.c.b16 %v2179, %v2179
          %v2244 = vpack.c.b16 %v2180, %v2180
          %v2245 = vpack.c.b16 %v2181, %v2181
          %v2246 = vpack.c.b16 %v2182, %v2182
          %v2247 = vpack.c.b16 %v2183, %v2183
          %v2248 = vpack.c.b16 %v2184, %v2184
          %v2249 = vpack.c.b16 %v2185, %v2185
          %v2250 = vpack.c.b16 %v2186, %v2186
          %v2251 = vpack.c.b16 %v2187, %v2187
          %v2252 = vpack.c.b16 %v2188, %v2188
          %v2253 = vpack.c.b16 %v2189, %v2189
          %v2254 = vpack.c.b16 %v2190, %v2190
          %v2255 = vpack.c.b16 %v2191, %v2191
          %v2256 = vpack.c.b16 %v2192, %v2192
          %v2257 = vpack.c.b16 %v2193, %v2193
          %v2258 = vpack.c.b16 %v2194, %v2194
          %v2259 = vpack.c.b16 %v2195, %v2195
          %v2260 = vpack.c.b16 %v2196, %v2196
          %v2261 = vpack.c.b16 %v2197, %v2197
          %v2262 = vpack.c.b16 %v2198, %v2198
          %v2263 = vpack.c.b16 %v2199, %v2199
          %v2264 = vpack.c.b16 %v2200, %v2200
          %v2265 = vpack.c.b16 %v2201, %v2201
          %v2266 = vpack.c.b16 %v2202, %v2202
          %v2267 = vpack.c.b16 %v2203, %v2203
          %v2268 = vpack.c.b16 %v2204, %v2204
          %v2269 = vpack.c.b16 %v2205, %v2205
          %v2270 = vpack.c.b16 %v2206, %v2206
          %v2271 = vpack.c.b16 %v2207, %v2207
          %v2272 = vpack.c.b16 %v2208, %v2208
          %v2273 = vpack.c.b16 %v2209, %v2209
          %v2274 = vpack.c.b16 %v2210, %v2210
          %v2275 = vpack.c.b16 %v2211, %v2211
          %v2276 = vpack.c.b16 %v2212, %v2212
          %v2277 = vpack.c.b16 %v2213, %v2213
          %v2278 = vpack.c.b16 %v2214, %v2214
          %v2279 = vpack.c.b16 %v2215, %v2215
          %v2280 = vpack.c.b16 %v2216, %v2216
          %v2281 = vpack.c.b16 %v2217, %v2217
          %v2282 = vpack.c.b16 %v2218, %v2218
          %v2283 = vpack.c.b16 %v2219, %v2219
          %v2284 = vpack.c.b16 %v2220, %v2220
          %v2285 = vpack.c.b16 %v2221, %v2221
          %v2286 = vpack.c.b16 %v2222, %v2222
          %v2287 = vpack.c.b16 %v2223, %v2223
          %v2288 = vpack.c.b16 %v2224, %v2224
          %v2289 = vpack.c.b16 %v2225, %v2225
          %v2290 = vpack.c.b16 %v2226, %v2226
          %v2291 = vpack.c.b16 %v2227, %v2227
          %v2292 = vpack.c.b16 %v2228, %v2228
          %v2293 = vpack.c.b16 %v2229, %v2229
          %v2294 = vpack.c.b16 %v2230, %v2230
          %v2295 = vpack.c.b16 %v2231, %v2231
          %v2296 = vpack.c.b16 %v2232, %v2232
          %v2297 = vpack.c.b16 %v2233, %v2233
          %v2298 = vpack.c.b16 %v2234, %v2234
          %v2299 = vpack.c.b16 %v2235, %v2235
          %vm2364 = vcmask 519168
          %2365 = vst.msk [vmem:[%s231] sm:$0xf] %vm2364, %v2236
          %2366 = vst.msk [vmem:[%s231 + $0x4] sm:$0xf] %vm2364, %v2237
          %2367 = vst.msk [vmem:[%s231 + $0x8] sm:$0xf] %vm2364, %v2238
          %2368 = vst.msk [vmem:[%s231 + $0xc] sm:$0xf] %vm2364, %v2239
          %2369 = vst.msk [vmem:[%s231 + $0x10] sm:$0xf] %vm2364, %v2240
          %2370 = vst.msk [vmem:[%s231 + $0x14] sm:$0xf] %vm2364, %v2241
          %2371 = vst.msk [vmem:[%s231 + $0x18] sm:$0xf] %vm2364, %v2242
          %2372 = vst.msk [vmem:[%s231 + $0x1c] sm:$0xf] %vm2364, %v2243
          %2373 = vst.msk [vmem:[%s231 + $0x20] sm:$0xf] %vm2364, %v2244
          %2374 = vst.msk [vmem:[%s231 + $0x24] sm:$0xf] %vm2364, %v2245
          %2375 = vst.msk [vmem:[%s231 + $0x28] sm:$0xf] %vm2364, %v2246
          %2376 = vst.msk [vmem:[%s231 + $0x2c] sm:$0xf] %vm2364, %v2247
          %2377 = vst.msk [vmem:[%s231 + $0x30] sm:$0xf] %vm2364, %v2248
          %2378 = vst.msk [vmem:[%s231 + $0x34] sm:$0xf] %vm2364, %v2249
          %2379 = vst.msk [vmem:[%s231 + $0x38] sm:$0xf] %vm2364, %v2250
          %2380 = vst.msk [vmem:[%s231 + $0x3c] sm:$0xf] %vm2364, %v2251
          %2381 = vst.msk [vmem:[%s231 + $0x40] sm:$0xf] %vm2364, %v2252
          %2382 = vst.msk [vmem:[%s231 + $0x44] sm:$0xf] %vm2364, %v2253
          %2383 = vst.msk [vmem:[%s231 + $0x48] sm:$0xf] %vm2364, %v2254
          %2384 = vst.msk [vmem:[%s231 + $0x4c] sm:$0xf] %vm2364, %v2255
          %2385 = vst.msk [vmem:[%s231 + $0x50] sm:$0xf] %vm2364, %v2256
          %2386 = vst.msk [vmem:[%s231 + $0x54] sm:$0xf] %vm2364, %v2257
          %2387 = vst.msk [vmem:[%s231 + $0x58] sm:$0xf] %vm2364, %v2258
          %2388 = vst.msk [vmem:[%s231 + $0x5c] sm:$0xf] %vm2364, %v2259
          %2389 = vst.msk [vmem:[%s231 + $0x60] sm:$0xf] %vm2364, %v2260
          %2390 = vst.msk [vmem:[%s231 + $0x64] sm:$0xf] %vm2364, %v2261
          %2391 = vst.msk [vmem:[%s231 + $0x68] sm:$0xf] %vm2364, %v2262
          %2392 = vst.msk [vmem:[%s231 + $0x6c] sm:$0xf] %vm2364, %v2263
          %2393 = vst.msk [vmem:[%s231 + $0x70] sm:$0xf] %vm2364, %v2264
          %2394 = vst.msk [vmem:[%s231 + $0x74] sm:$0xf] %vm2364, %v2265
          %2395 = vst.msk [vmem:[%s231 + $0x78] sm:$0xf] %vm2364, %v2266
          %2396 = vst.msk [vmem:[%s231 + $0x7c] sm:$0xf] %vm2364, %v2267
          %2397 = vst.msk [vmem:[%s231 + $0x80] sm:$0xf] %vm2364, %v2268
          %2398 = vst.msk [vmem:[%s231 + $0x84] sm:$0xf] %vm2364, %v2269
          %2399 = vst.msk [vmem:[%s231 + $0x88] sm:$0xf] %vm2364, %v2270
          %2400 = vst.msk [vmem:[%s231 + $0x8c] sm:$0xf] %vm2364, %v2271
          %2401 = vst.msk [vmem:[%s231 + $0x90] sm:$0xf] %vm2364, %v2272
          %2402 = vst.msk [vmem:[%s231 + $0x94] sm:$0xf] %vm2364, %v2273
          %2403 = vst.msk [vmem:[%s231 + $0x98] sm:$0xf] %vm2364, %v2274
          %2404 = vst.msk [vmem:[%s231 + $0x9c] sm:$0xf] %vm2364, %v2275
          %2405 = vst.msk [vmem:[%s231 + $0xa0] sm:$0xf] %vm2364, %v2276
          %2406 = vst.msk [vmem:[%s231 + $0xa4] sm:$0xf] %vm2364, %v2277
          %2407 = vst.msk [vmem:[%s231 + $0xa8] sm:$0xf] %vm2364, %v2278
          %2408 = vst.msk [vmem:[%s231 + $0xac] sm:$0xf] %vm2364, %v2279
          %2409 = vst.msk [vmem:[%s231 + $0xb0] sm:$0xf] %vm2364, %v2280
          %2410 = vst.msk [vmem:[%s231 + $0xb4] sm:$0xf] %vm2364, %v2281
          %2411 = vst.msk [vmem:[%s231 + $0xb8] sm:$0xf] %vm2364, %v2282
          %2412 = vst.msk [vmem:[%s231 + $0xbc] sm:$0xf] %vm2364, %v2283
          %2413 = vst.msk [vmem:[%s231 + $0xc0] sm:$0xf] %vm2364, %v2284
          %2414 = vst.msk [vmem:[%s231 + $0xc4] sm:$0xf] %vm2364, %v2285
          %2415 = vst.msk [vmem:[%s231 + $0xc8] sm:$0xf] %vm2364, %v2286
          %2416 = vst.msk [vmem:[%s231 + $0xcc] sm:$0xf] %vm2364, %v2287
          %2417 = vst.msk [vmem:[%s231 + $0xd0] sm:$0xf] %vm2364, %v2288
          %2418 = vst.msk [vmem:[%s231 + $0xd4] sm:$0xf] %vm2364, %v2289
          %2419 = vst.msk [vmem:[%s231 + $0xd8] sm:$0xf] %vm2364, %v2290
          %2420 = vst.msk [vmem:[%s231 + $0xdc] sm:$0xf] %vm2364, %v2291
          %2421 = vst.msk [vmem:[%s231 + $0xe0] sm:$0xf] %vm2364, %v2292
          %2422 = vst.msk [vmem:[%s231 + $0xe4] sm:$0xf] %vm2364, %v2293
          %2423 = vst.msk [vmem:[%s231 + $0xe8] sm:$0xf] %vm2364, %v2294
          %2424 = vst.msk [vmem:[%s231 + $0xec] sm:$0xf] %vm2364, %v2295
          %2425 = vst.msk [vmem:[%s231 + $0xf0] sm:$0xf] %vm2364, %v2296
          %2426 = vst.msk [vmem:[%s231 + $0xf4] sm:$0xf] %vm2364, %v2297
          %2427 = vst.msk [vmem:[%s231 + $0xf8] sm:$0xf] %vm2364, %v2298
          %2428 = vst.msk [vmem:[%s231 + $0xfc] sm:$0xf] %vm2364, %v2299
        $region44: #{tpu_custom_call.1} parent=31 // pred_fallthru
          _
        %s2429 = smul.u32 64, %s21
        %p2430 = scmp.lt.s32.totalorder %s2429, 127
        %s2431 = scalar_select %p2430, %s2429, 127
        %s2432 = smul.addr %s2431, 4
        %s2433 = scalar_lea.vmem %s3, %s2432
        // Predicated region
        $region45: #{tpu_custom_call.1} parent=31 // pred_check
          %p2434 = pneg %p122
        $region46: #{tpu_custom_call.1} parent=31 // pred_check_branch
          %2436 = sbr.rel (%p2434) target = $region48
        $region47: #{tpu_custom_call.1} parent=31 // pred_region
          %s2437 = smul.u32 64, %s21
        $region48: #{tpu_custom_call.1} parent=31 // pred_fallthru
          _
      $region32: #{tpu_custom_call.1} parent=5 // pred_fallthru
        _
      %p2438 = scmp.le.s32.totalorder 2, %s12
      // Predicated region
      $region49: #{tpu_custom_call.1} parent=5 // pred_check
        %p2439 = pneg %p2438
      $region50: #{tpu_custom_call.1} parent=5 // pred_check_branch
        %2441 = sbr.rel (%p2439) target = $region52
      $region51: #{tpu_custom_call.1} parent=5 // pred_region
        %s2442 = ssub.s32 %s12, 2
        // Predicated region
        $region53: #{tpu_custom_call.1} parent=51 // pred_check
          %p2443 = pneg %p128
        $region54: #{tpu_custom_call.1} parent=51 // pred_check_branch
          %2445 = sbr.rel (%p2443) target = $region56
        $region55: #{tpu_custom_call.1} parent=51 // pred_region
          %s2446 = smul.u32 64, %s23
          %p2447 = scmp.lt.s32.totalorder %s2446, 127
          %s2448 = scalar_select %p2447, %s2446, 127
          %s2449 = smul.addr %s2448, 4
          %s2450 = scalar_lea.vmem %s3, %s2449
        $region56: #{tpu_custom_call.1} parent=51 // pred_fallthru
          _
      $region52: #{tpu_custom_call.1} parent=5 // pred_fallthru
        _
    $region6: #{tpu_custom_call.1} parent=1 // loop_footer
      %s16 = sadd.s32 1, %s12
    $region7: #{tpu_custom_call.1} parent=1 // loop_footer_branch
      %11 = sbr.rel target = $region3
    $region8: #{tpu_custom_call.1} parent=1 // loop_exit
      _
    %2451 = vsyncpa [#allocation4], 1
    %s2452 = scalar_lea.sflag [#allocation4], 1
    %2453 = vsyncpa %s2452, 1

</llo_original>
